<compile_context>
chip_gen: v6e
topology: v6e:2x2x1
jax: 0.10.0
libtpu: 0.0.40
codegen_flags: <defaults>
</compile_context>

<pallas_src>
import functools

import jax
import jax.numpy as jnp
from jax.experimental import pallas as pl
from jax.experimental.pallas import tpu as pltpu


def _round_up(x, m):
    return (x + m - 1) // m * m


# ----------------------------- Pallas kernels -----------------------------

def _make_act_mm_kernel(act, nk, with_stats, n_channels):
    """Builds the fused act(A) @ W kernel.

    A arrives as bf16 tiles; the activation is evaluated directly in bf16 and
    fed to the MXU with f32 accumulation.  If `with_stats`, the finalize also
    emits per-block masked partial (sum, sumsq) over the f32 result (before the
    bf16 downcast) for fused BatchNorm statistics.  The result lane layout is
    (ry, rx, co) with co in [0, n_channels); the per-row keep flags (crop mask
    + row validity) arrive in a tiny [tm, 8] f32 input.
    """

    def kernel(*refs):
        if with_stats:
            rf_ref, a_ref, w_ref, o_ref, st_ref = refs[:5]
            scratch = refs[5:]
        else:
            a_ref, w_ref, o_ref = refs[:3]
            scratch = refs[3:]
        acc_ref = scratch[0] if nk > 1 else None

        a = a_ref[...]
        if act == "leaky_relu":
            a = jnp.where(a >= 0, a, a * 0.2)
        elif act == "relu":
            a = jnp.maximum(a, 0.0)
        part = jnp.dot(a, w_ref[...], preferred_element_type=jnp.float32)

        if nk > 1:
            @pl.when(pl.program_id(1) == 0)
            def _init():
                acc_ref[...] = jnp.zeros_like(acc_ref)
            acc_ref[...] += part

        def _finalize():
            r = part if nk == 1 else acc_ref[...]
            o_ref[...] = r.astype(o_ref.dtype)
            if with_stats:
                rf = rf_ref[...]                               # [tm, 8] f32 flags
                lane = jax.lax.broadcasted_iota(jnp.int32, (1, r.shape[1]), 1)
                par = ((lane >= n_channels).astype(jnp.int32)
                       + (lane >= 2 * n_channels).astype(jnp.int32)
                       + (lane >= 3 * n_channels).astype(jnp.int32))
                ry1 = par >= 2                                 # parity row bit
                rx1 = (par == 1) | (par == 3)                  # parity col bit
                keep_h = jnp.where(ry1, rf[:, 2:3], rf[:, 1:2])
                keep_w = jnp.where(rx1, rf[:, 4:5], rf[:, 3:4])
                rm = r * (keep_h * keep_w * rf[:, 0:1])
                s = jnp.sum(rm, axis=0, keepdims=True)
                sq = jnp.sum(rm * rm, axis=0, keepdims=True)
                st_ref[...] = jnp.concatenate([s, sq], axis=0)[None]

        if nk == 1:
            _finalize()
        else:
            pl.when(pl.program_id(1) == pl.num_programs(1) - 1)(_finalize)

    return kernel


def act_matmul(a, w, act, *, out_dtype=jnp.bfloat16, tm=512,
               rowflags=None, stats_channels=None,
               weight_resident_bytes=8 << 20):
    """out = act(a) @ w. a: [M, K] bf16, w: [K, Nout] bf16, Nout % 128 == 0.

    If `rowflags` ([M, 8] f32 keep flags) and `stats_channels` are given, also
    returns fused, crop-masked BatchNorm partials [nblk, 2, Nout] f32.
    """
    M, K = a.shape
    K2, Nout = w.shape
    assert K == K2
    assert Nout % 128 == 0, "pad Nout to a lane-dense multiple of 128"
    with_stats = rowflags is not None
    if with_stats:
        assert stats_channels is not None and rowflags.shape == (M, 8)

    # --- K tiling: keep the whole weight resident when it fits in VMEM ---
    Kp = _round_up(K, 128)
    if Kp * Nout * 2 <= weight_resident_bytes:
        tk = Kp                                   # single K step, W DMA'd once
    elif Kp % 512 == 0:
        tk = 512
    elif Kp % 256 == 0:
        tk = 256
    else:
        tk = 128
    nk = Kp // tk

    # --- M tiling: pad (never shrink silently); guarantee >= 2 parallel blocks
    #     (keeps both v7x TensorCores busy) whenever M can be split. ---
    tm_eff = min(tm, _round_up(M, 8))
    if _round_up(M, tm_eff) // tm_eff < 2 and M > 8:
        tm_eff = _round_up((M + 1) // 2, 8)
    Mp = _round_up(M, tm_eff)
    nblk = Mp // tm_eff

    a_p = a if (Mp == M and Kp == K) else jnp.pad(a, ((0, Mp - M), (0, Kp - K)))
    w_p = w if Kp == K else jnp.pad(w, ((0, Kp - K), (0, 0)))

    # --- VMEM budget: double-buffered A/W/out (+acc, +stats), capped for v7x.
    out_bytes = jnp.dtype(out_dtype).itemsize
    need = (2 * tm_eff * tk * 2 + 2 * tk * Nout * 2 + 2 * tm_eff * Nout * out_bytes
            + (tm_eff * Nout * 4 if nk > 1 else 0)
            + ((2 * tm_eff * 8 * 4 + 2 * 2 * Nout * 4) if with_stats else 0))
    vmem_limit = min(max(2 * need, 32 << 20), 48 << 20)

    kernel = _make_act_mm_kernel(act, nk, with_stats,
                                 stats_channels if with_stats else 0)

    if nk == 1:
        grid = (nblk,)
        dims = ("parallel",)
        a_spec = pl.BlockSpec((tm_eff, tk), lambda i: (i, 0))
        w_spec = pl.BlockSpec((tk, Nout), lambda i: (0, 0))      # resident W
        o_spec = pl.BlockSpec((tm_eff, Nout), lambda i: (i, 0))
        rf_spec = pl.BlockSpec((tm_eff, 8), lambda i: (i, 0))
        st_spec = pl.BlockSpec((1, 2, Nout), lambda i: (i, 0, 0))
        scratch = []
    else:
        grid = (nblk, nk)
        dims = ("parallel", "arbitrary")
        a_spec = pl.BlockSpec((tm_eff, tk), lambda i, k: (i, k))
        w_spec = pl.BlockSpec((tk, Nout), lambda i, k: (k, 0))
        o_spec = pl.BlockSpec((tm_eff, Nout), lambda i, k: (i, 0))
        rf_spec = pl.BlockSpec((tm_eff, 8), lambda i, k: (i, 0))
        st_spec = pl.BlockSpec((1, 2, Nout), lambda i, k: (i, 0, 0))
        scratch = [pltpu.VMEM((tm_eff, Nout), jnp.float32)]

    if with_stats:
        rf_p = rowflags if Mp == M else jnp.pad(rowflags, ((0, Mp - M), (0, 0)))
        in_specs = [rf_spec, a_spec, w_spec]
        out_shape = (jax.ShapeDtypeStruct((Mp, Nout), out_dtype),
                     jax.ShapeDtypeStruct((nblk, 2, Nout), jnp.float32))
        out_specs = [o_spec, st_spec]
        args = (rf_p, a_p, w_p)
    else:
        in_specs = [a_spec, w_spec]
        out_shape = jax.ShapeDtypeStruct((Mp, Nout), out_dtype)
        out_specs = o_spec
        args = (a_p, w_p)

    res = pl.pallas_call(
        kernel,
        out_shape=out_shape,
        grid_spec=pltpu.PrefetchScalarGridSpec(
            num_scalar_prefetch=0,
            grid=grid,
            in_specs=in_specs,
            out_specs=out_specs,
            scratch_shapes=scratch),
        compiler_params=pltpu.CompilerParams(
            dimension_semantics=dims, vmem_limit_bytes=vmem_limit),
    )(*args)

    if with_stats:
        out, stats = res
        out = out[:M] if Mp != M else out
        return out, stats
    out = res
    return out[:M] if Mp != M else out


# ------------------------------ JAX glue -----------------------------------

def _extract_patches(x_nhwc, k, stride, pad):
    """im2col: [N*OH*OW, k*k*C], column order (kh, kw, C).  Pure-XLA glue.

    # TODO(synk): for large inputs, build the patches inside the matmul kernel
    # (overlapping output-row blocks + halo DMA) instead of materializing the
    # k*k-expanded matrix in HBM; here it is only emitted in bf16.
    """
    N, H, W, C = x_nhwc.shape
    xp = jnp.pad(x_nhwc, ((0, 0), (pad, pad), (pad, pad), (0, 0)))
    OH = (H + 2 * pad - k) // stride + 1
    OW = (W + 2 * pad - k) // stride + 1
    cols = []
    for kh in range(k):
        for kw in range(k):
            sl = jax.lax.slice(
                xp,
                (0, kh, kw, 0),
                (N, kh + stride * (OH - 1) + 1, kw + stride * (OW - 1) + 1, C),
                (1, stride, stride, 1))
            cols.append(sl)
    patches = jnp.stack(cols, axis=3)                      # [N, OH, OW, k*k, C]
    return patches.reshape(N * OH * OW, k * k * C), (N, OH, OW)


def unet_innermost_forward(x_nchw, params):
    """UnetSkipConnectionBlock(innermost=True) forward. x: [N, input_nc, H, W]."""
    N, Cin, H, W = x_nchw.shape
    x = jnp.transpose(x_nchw, (0, 2, 3, 1)).astype(jnp.bfloat16)   # NHWC

    # ---- down: LeakyReLU(0.2) + Conv2d(k4, s2, p1, no bias), one fused matmul ----
    patches, (n, oh, ow) = _extract_patches(x, k=4, stride=2, pad=1)
    w_down = params["w_down"]                              # (inner_nc, Cin, 4, 4)
    inner_nc = w_down.shape[0]
    inner_p = _round_up(inner_nc, 128)                     # lane-dense out channels
    wd = jnp.transpose(w_down, (2, 3, 1, 0)).reshape(16 * Cin, inner_nc)
    wd = jnp.pad(wd, ((0, 0), (0, inner_p - inner_nc))).astype(jnp.bfloat16)
    d = act_matmul(patches, wd, "leaky_relu", out_dtype=jnp.bfloat16)
    d = d.reshape(n, oh, ow, inner_p)                      # padded channels exact 0

    # ---- up: ReLU + ConvTranspose2d(k4, s2, p1) via sub-pixel decomposition ----
    # Each 2x2 window of (zero-padded) d produces one 2x2 block of output pixels;
    # the four parities live in the matmul N dim (Nout = 4*outer_nc): no
    # zero-dilated input and no MACs on structural zeros.
    up_patches, (_, ohp, owp) = _extract_patches(d, k=2, stride=1, pad=1)
    w_up = params["w_up"]                                  # (inner_nc, outer_nc, 4, 4)
    outer_nc = w_up.shape[1]
    # Kernel tap for sub-output (ry, rx) and input tap (di, dj):
    #   kh = 2 + ry - 2*di,  kw = 2 + rx - 2*dj
    idx = 2 + jnp.arange(2)[None, :] - 2 * jnp.arange(2)[:, None]      # [d, r] -> k
    w6 = w_up[:, :, idx[:, None, :, None], idx[None, :, None, :]]      # (ci,co,di,dj,ry,rx)
    w6 = jnp.transpose(w6, (2, 3, 0, 4, 5, 1))                         # (di,dj,ci,ry,rx,co)
    w6 = jnp.pad(w6, ((0, 0), (0, 0), (0, inner_p - inner_nc),
                      (0, 0), (0, 0), (0, 0)))
    wu = w6.reshape(4 * inner_p, 4 * outer_nc)
    up_p = _round_up(4 * outer_nc, 128)
    wu = jnp.pad(wu, ((0, 0), (0, up_p - 4 * outer_nc))).astype(jnp.bfloat16)

    # Per-row crop/validity flags for the fused BN statistics (tiny, XLA-built):
    # output row = 2*hp + ry - 1, col = 2*wp + rx - 1; crop keeps [0, 2*oh) x [0, 2*ow).
    M2 = n * ohp * owp
    rows = jnp.arange(M2, dtype=jnp.int32)
    wp = rows % owp
    hp = (rows // owp) % ohp
    zeros = jnp.zeros((M2,), jnp.float32)
    rowflags = jnp.stack(
        [jnp.ones((M2,), jnp.float32),          # row valid
         (hp >= 1).astype(jnp.float32),         # ry = 0 survives crop
         (hp <= oh - 1).astype(jnp.float32),    # ry = 1 survives crop
         (wp >= 1).astype(jnp.float32),         # rx = 0 survives crop
         (wp <= ow - 1).astype(jnp.float32),    # rx = 1 survives crop
         zeros, zeros, zeros], axis=1)          # [M2, 8]

    u_raw, stats = act_matmul(up_patches, wu, "relu", out_dtype=jnp.bfloat16,
                              rowflags=rowflags, stats_channels=outer_nc)

    # ---- upnorm: BatchNorm2d stats from the fused partials (tiny XLA reduce) ----
    s = jnp.sum(stats, axis=0)[:, :4 * outer_nc].reshape(2, 4, outer_nc).sum(axis=1)
    cnt = n * (2 * oh) * (2 * ow)
    mean = s[0] / cnt
    var = jnp.maximum(s[1] / cnt - mean * mean, 0.0)       # clamp cancellation
    scale = params["gamma"] * jax.lax.rsqrt(var + 1e-5)
    shift = params["beta"] - mean * scale

    # ---- pixel-shuffle + crop + normalize + skip concat (+ NCHW) ----
    # Pure data movement / elementwise: left to XLA so the scale/shift fuses
    # into the shuffle copy instead of costing an extra HBM pass.
    u = u_raw[:M2, :4 * outer_nc].astype(jnp.float32)
    u = u.reshape(n, ohp, owp, 2, 2, outer_nc) * scale + shift
    u = jnp.transpose(u, (0, 1, 3, 2, 4, 5)).reshape(n, 2 * ohp, 2 * owp, outer_nc)
    y = u[:, 1:2 * oh + 1, 1:2 * ow + 1, :]                # [N, H, W, outer_nc]

    y_nchw = jnp.transpose(y, (0, 3, 1, 2))
    return jnp.concatenate([x_nchw, y_nchw], axis=1)


# ------------------------ pure-JAX reference check -------------------------

def reference_forward(x, params):
    h = jnp.where(x >= 0, x, 0.2 * x)
    d = jax.lax.conv_general_dilated(
        h, params["w_down"], window_strides=(2, 2), padding=((1, 1), (1, 1)),
        dimension_numbers=("NCHW", "OIHW", "NCHW"))
    h2 = jnp.maximum(d, 0.0)
    w_conv = jnp.transpose(jnp.flip(params["w_up"], (2, 3)), (1, 0, 2, 3))
    u = jax.lax.conv_general_dilated(
        h2, w_conv, window_strides=(1, 1), padding=((2, 2), (2, 2)),
        lhs_dilation=(2, 2), dimension_numbers=("NCHW", "OIHW", "NCHW"))
    mean = jnp.mean(u, axis=(0, 2, 3), keepdims=True)
    var = jnp.mean(jnp.square(u - mean), axis=(0, 2, 3), keepdims=True)
    g = params["gamma"].reshape(1, -1, 1, 1)
    b = params["beta"].reshape(1, -1, 1, 1)
    y = (u - mean) * jax.lax.rsqrt(var + 1e-5) * g + b
    return jnp.concatenate([x, y], axis=1)


# --------------------------------- main ------------------------------------

if __name__ == "__main__":
    key = jax.random.PRNGKey(0)
    k1, k2, k3, k4, k5 = jax.random.split(key, 5)

    N, outer_nc, inner_nc, H, W = 2, 4, 8, 16, 16
    input_nc = outer_nc  # innermost: input_nc defaults to outer_nc

    x = jax.random.normal(k1, (N, input_nc, H, W), jnp.float32)
    params = {
        # Conv2d weight: (out=inner_nc, in=input_nc, 4, 4)
        "w_down": 0.1 * jax.random.normal(k2, (inner_nc, input_nc, 4, 4), jnp.float32),
        # ConvTranspose2d weight: (in=inner_nc, out=outer_nc, 4, 4)
        "w_up": 0.1 * jax.random.normal(k3, (inner_nc, outer_nc, 4, 4), jnp.float32),
        # BatchNorm2d affine params
        "gamma": 1.0 + 0.1 * jax.random.normal(k4, (outer_nc,), jnp.float32),
        "beta": 0.1 * jax.random.normal(k5, (outer_nc,), jnp.float32),
    }

    out = jax.jit(unet_innermost_forward)(x, params)
    out = jax.block_until_ready(out)

    ref = reference_forward(x, params)
    assert out.shape == (N, input_nc + outer_nc, H, W), out.shape
    max_err = float(jnp.max(jnp.abs(out - ref)))
    # bf16 MXU operands / bf16 u_raw (f32 accumulation & stats) => ~1e-2
    # deviation after BN; 5e-2 tolerance.
    assert jnp.allclose(out, ref, rtol=5e-2, atol=5e-2), max_err

    print("KERNEL_OK")
</pallas_src>

<mosaic_0001>
module attributes {stable_mosaic.version = 11 : i64} {
  func.func @kernel(%arg0: i32, %arg1: memref<64x128xbf16, #tpu.memory_space<vmem>>, %arg2: memref<128x128xbf16, #tpu.memory_space<vmem>>, %arg3: memref<64x128xbf16, #tpu.memory_space<vmem>>) attributes {dimension_semantics = [#tpu.dimension_semantics<parallel>], iteration_bounds = array<i64: 2>, scalar_prefetch = 0 : i64, scratch_operands = 0 : i64, tpu.core_type = #tpu.core_type<tc>, window_params = [{transform_indices = @transform_0, window_bounds = array<i64: 64, 128>}, {pipeline_mode = #tpu.pipeline_mode<synchronous>, transform_indices = @transform_1, window_bounds = array<i64: 128, 128>}, {transform_indices = @transform_2, window_bounds = array<i64: 64, 128>}]} {
    %c0 = arith.constant 0 : index
    %c0_0 = arith.constant 0 : index
    %0 = vector.load %arg1[%c0, %c0_0] : memref<64x128xbf16, #tpu.memory_space<vmem>>, vector<64x128xbf16>
    %cst = arith.constant 0.000000e+00 : bf16
    %1 = vector.broadcast %cst : bf16 to vector<64x128xbf16>
    %2 = arith.cmpf oge, %0, %1 : vector<64x128xbf16>
    %cst_1 = arith.constant 2.001950e-01 : bf16
    %3 = vector.broadcast %cst_1 : bf16 to vector<64x128xbf16>
    %4 = arith.mulf %0, %3 : vector<64x128xbf16>
    %5 = arith.select %2, %0, %4 : vector<64x128xi1>, vector<64x128xbf16>
    %c0_2 = arith.constant 0 : index
    %c0_3 = arith.constant 0 : index
    %6 = vector.load %arg2[%c0_2, %c0_3] : memref<128x128xbf16, #tpu.memory_space<vmem>>, vector<128x128xbf16>
    %cst_4 = arith.constant dense<0.000000e+00> : vector<64x128xf32>
    %7 = tpu.matmul %5, %6, %cst_4 {dimension_numbers = #tpu.dot_dimension_numbers<[1], [0], [0], [1], [0, 0, 1, 1], [], []>} : vector<64x128xbf16>, vector<128x128xbf16>, vector<64x128xf32> -> vector<64x128xf32>
    %8 = arith.truncf %7 : vector<64x128xf32> to vector<64x128xbf16>
    %c0_5 = arith.constant 0 : index
    %c0_6 = arith.constant 0 : index
    %9 = vector.load %arg3[%c0_5, %c0_6] : memref<64x128xbf16, #tpu.memory_space<vmem>>, vector<64x128xbf16>
    tpu.vector_store %arg3[%c0_5, %c0_6], %8 {strides = array<i32>} : memref<64x128xbf16, #tpu.memory_space<vmem>>, vector<64x128xbf16>,
    return
  }
  func.func @transform_0(%arg0: i32) -> (i32, i32) {
    %c0_i32 = arith.constant 0 : i32
    %c0_i32_0 = arith.constant 0 : i32
    return %arg0, %c0_i32 : i32, i32
  }
  func.func @transform_1(%arg0: i32) -> (i32, i32) {
    %c0_i32 = arith.constant 0 : i32
    %c0_i32_0 = arith.constant 0 : i32
    %c0_i32_1 = arith.constant 0 : i32
    return %c0_i32, %c0_i32_0 : i32, i32
  }
  func.func @transform_2(%arg0: i32) -> (i32, i32) {
    %c0_i32 = arith.constant 0 : i32
    %c0_i32_0 = arith.constant 0 : i32
    return %arg0, %c0_i32 : i32, i32
  }
}

module attributes {stable_mosaic.version = 11 : i64} {
  func.func @kernel(%arg0: i32, %arg1: memref<88x8xf32, #tpu.memory_space<vmem>>, %arg2: memref<88x512xbf16, #tpu.memory_space<vmem>>, %arg3: memref<512x128xbf16, #tpu.memory_space<vmem>>, %arg4: memref<88x128xbf16, #tpu.memory_space<vmem>>, %arg5: memref<1x2x128xf32, #tpu.memory_space<vmem>>) attributes {dimension_semantics = [#tpu.dimension_semantics<parallel>], iteration_bounds = array<i64: 2>, scalar_prefetch = 0 : i64, scratch_operands = 0 : i64, tpu.core_type = #tpu.core_type<tc>, window_params = [{transform_indices = @transform_0, window_bounds = array<i64: 88, 8>}, {transform_indices = @transform_1, window_bounds = array<i64: 88, 512>}, {pipeline_mode = #tpu.pipeline_mode<synchronous>, transform_indices = @transform_2, window_bounds = array<i64: 512, 128>}, {transform_indices = @transform_3, window_bounds = array<i64: 88, 128>}, {transform_indices = @transform_4, window_bounds = array<i64: 1, 2, 128>}]} {
    %c0 = arith.constant 0 : index
    %c0_0 = arith.constant 0 : index
    %0 = vector.load %arg2[%c0, %c0_0] : memref<88x512xbf16, #tpu.memory_space<vmem>>, vector<88x512xbf16>
    %cst = arith.constant 0.000000e+00 : bf16
    %1 = vector.broadcast %cst : bf16 to vector<88x512xbf16>
    %2 = arith.maximumf %0, %1 : vector<88x512xbf16>
    %c0_1 = arith.constant 0 : index
    %c0_2 = arith.constant 0 : index
    %3 = vector.load %arg3[%c0_1, %c0_2] : memref<512x128xbf16, #tpu.memory_space<vmem>>, vector<512x128xbf16>
    %cst_3 = arith.constant dense<0.000000e+00> : vector<88x128xf32>
    %4 = tpu.matmul %2, %3, %cst_3 {dimension_numbers = #tpu.dot_dimension_numbers<[1], [0], [0], [1], [0, 0, 1, 1], [], []>} : vector<88x512xbf16>, vector<512x128xbf16>, vector<88x128xf32> -> vector<88x128xf32>
    %5 = arith.truncf %4 : vector<88x128xf32> to vector<88x128xbf16>
    %c0_4 = arith.constant 0 : index
    %c0_5 = arith.constant 0 : index
    %6 = vector.load %arg4[%c0_4, %c0_5] : memref<88x128xbf16, #tpu.memory_space<vmem>>, vector<88x128xbf16>
    tpu.vector_store %arg4[%c0_4, %c0_5], %5 {strides = array<i32>} : memref<88x128xbf16, #tpu.memory_space<vmem>>, vector<88x128xbf16>,
    %c0_6 = arith.constant 0 : index
    %c0_7 = arith.constant 0 : index
    %7 = vector.load %arg1[%c0_6, %c0_7] : memref<88x8xf32, #tpu.memory_space<vmem>>, vector<88x8xf32>
    %8 = tpu.iota {dimensions = array<i32: 1>} : vector<1x128xi32>
    %c4_i32 = arith.constant 4 : i32
    %9 = vector.broadcast %c4_i32 : i32 to vector<1x128xi32>
    %10 = arith.cmpi sge, %8, %9 : vector<1x128xi32>
    %11 = arith.extui %10 : vector<1x128xi1> to vector<1x128xi32>
    %c8_i32 = arith.constant 8 : i32
    %12 = vector.broadcast %c8_i32 : i32 to vector<1x128xi32>
    %13 = arith.cmpi sge, %8, %12 : vector<1x128xi32>
    %14 = arith.extui %13 : vector<1x128xi1> to vector<1x128xi32>
    %15 = arith.addi %11, %14 : vector<1x128xi32>
    %c12_i32 = arith.constant 12 : i32
    %16 = vector.broadcast %c12_i32 : i32 to vector<1x128xi32>
    %17 = arith.cmpi sge, %8, %16 : vector<1x128xi32>
    %18 = arith.extui %17 : vector<1x128xi1> to vector<1x128xi32>
    %19 = arith.addi %15, %18 : vector<1x128xi32>
    %c2_i32 = arith.constant 2 : i32
    %20 = vector.broadcast %c2_i32 : i32 to vector<1x128xi32>
    %21 = arith.cmpi sge, %19, %20 : vector<1x128xi32>
    %c1_i32 = arith.constant 1 : i32
    %22 = vector.broadcast %c1_i32 : i32 to vector<1x128xi32>
    %23 = arith.cmpi eq, %19, %22 : vector<1x128xi32>
    %c3_i32 = arith.constant 3 : i32
    %24 = vector.broadcast %c3_i32 : i32 to vector<1x128xi32>
    %25 = arith.cmpi eq, %19, %24 : vector<1x128xi32>
    %26 = arith.ori %23, %25 : vector<1x128xi1>
    %27 = vector.extract_strided_slice %7 {offsets = [0, 2], sizes = [88, 1], strides = [1, 1]} : vector<88x8xf32> to vector<88x1xf32>
    %28 = vector.extract_strided_slice %7 {offsets = [0, 1], sizes = [88, 1], strides = [1, 1]} : vector<88x8xf32> to vector<88x1xf32>
    %29 = vector.shape_cast %21 : vector<1x128xi1> to vector<1x128xi1>
    %30 = vector.broadcast %29 : vector<1x128xi1> to vector<88x128xi1>
    %31 = vector.shape_cast %27 : vector<88x1xf32> to vector<88x1xf32>
    %32 = vector.broadcast %31 : vector<88x1xf32> to vector<88x128xf32>
    %33 = vector.shape_cast %28 : vector<88x1xf32> to vector<88x1xf32>
    %34 = vector.broadcast %33 : vector<88x1xf32> to vector<88x128xf32>
    %35 = arith.select %30, %32, %34 : vector<88x128xi1>, vector<88x128xf32>
    %36 = vector.extract_strided_slice %7 {offsets = [0, 4], sizes = [88, 1], strides = [1, 1]} : vector<88x8xf32> to vector<88x1xf32>
    %37 = vector.extract_strided_slice %7 {offsets = [0, 3], sizes = [88, 1], strides = [1, 1]} : vector<88x8xf32> to vector<88x1xf32>
    %38 = vector.shape_cast %26 : vector<1x128xi1> to vector<1x128xi1>
    %39 = vector.broadcast %38 : vector<1x128xi1> to vector<88x128xi1>
    %40 = vector.shape_cast %36 : vector<88x1xf32> to vector<88x1xf32>
    %41 = vector.broadcast %40 : vector<88x1xf32> to vector<88x128xf32>
    %42 = vector.shape_cast %37 : vector<88x1xf32> to vector<88x1xf32>
    %43 = vector.broadcast %42 : vector<88x1xf32> to vector<88x128xf32>
    %44 = arith.select %39, %41, %43 : vector<88x128xi1>, vector<88x128xf32>
    %45 = arith.mulf %35, %44 : vector<88x128xf32>
    %46 = vector.extract_strided_slice %7 {offsets = [0, 0], sizes = [88, 1], strides = [1, 1]} : vector<88x8xf32> to vector<88x1xf32>
    %47 = vector.broadcast %46 : vector<88x1xf32> to vector<88x128xf32>
    %48 = arith.mulf %45, %47 : vector<88x128xf32>
    %49 = arith.mulf %4, %48 : vector<88x128xf32>
    %cst_8 = arith.constant dense<0.000000e+00> : vector<128xf32>
    %50 = vector.multi_reduction <add>, %49, %cst_8 [0] : vector<88x128xf32> to vector<128xf32>
    %51 = vector.shape_cast %50 : vector<128xf32> to vector<1x128xf32>
    %52 = arith.mulf %49, %49 : vector<88x128xf32>
    %cst_9 = arith.constant dense<0.000000e+00> : vector<128xf32>
    %53 = vector.multi_reduction <add>, %52, %cst_9 [0] : vector<88x128xf32> to vector<128xf32>
    %54 = vector.shape_cast %53 : vector<128xf32> to vector<1x128xf32>
    %55 = tpu.concatenate %51, %54 in 0 : vector<1x128xf32>, vector<1x128xf32> -> vector<2x128xf32>
    %56 = vector.shape_cast %55 : vector<2x128xf32> to vector<1x2x128xf32>
    %c0_10 = arith.constant 0 : index
    %c0_11 = arith.constant 0 : index
    %c0_12 = arith.constant 0 : index
    %57 = vector.load %arg5[%c0_10, %c0_11, %c0_12] : memref<1x2x128xf32, #tpu.memory_space<vmem>>, vector<1x2x128xf32>
    tpu.vector_store %arg5[%c0_10, %c0_11, %c0_12], %56 {strides = array<i32>} : memref<1x2x128xf32, #tpu.memory_space<vmem>>, vector<1x2x128xf32>,
    return
  }
  func.func @transform_0(%arg0: i32) -> (i32, i32) {
    %c0_i32 = arith.constant 0 : i32
    %c0_i32_0 = arith.constant 0 : i32
    return %arg0, %c0_i32 : i32, i32
  }
  func.func @transform_1(%arg0: i32) -> (i32, i32) {
    %c0_i32 = arith.constant 0 : i32
    %c0_i32_0 = arith.constant 0 : i32
    return %arg0, %c0_i32 : i32, i32
  }
  func.func @transform_2(%arg0: i32) -> (i32, i32) {
    %c0_i32 = arith.constant 0 : i32
    %c0_i32_0 = arith.constant 0 : i32
    %c0_i32_1 = arith.constant 0 : i32
    return %c0_i32, %c0_i32_0 : i32, i32
  }
  func.func @transform_3(%arg0: i32) -> (i32, i32) {
    %c0_i32 = arith.constant 0 : i32
    %c0_i32_0 = arith.constant 0 : i32
    return %arg0, %c0_i32 : i32, i32
  }
  func.func @transform_4(%arg0: i32) -> (i32, i32, i32) {
    %c0_i32 = arith.constant 0 : i32
    %c0_i32_0 = arith.constant 0 : i32
    %c0_i32_1 = arith.constant 0 : i32
    return %arg0, %c0_i32, %c0_i32_0 : i32, i32, i32
  }
}

</mosaic_0001>

<llo_original>
// kernel: unet_innermost_forward.2
$region0: #{unet_innermost_forward.2}
  #allocation0 [shape = 'u32[]', space=smem, size = 0x4, offset = 0x4, fixed_abs, tag = 'smem constant byte address 0x4 - core index']
  #allocation1 [shape = 'u32[144,128]{1,0:T(1,128)}', space=vmem, size = 0x12000, scoped, tag = 'internal scratch']
  %s0 = inlined_call_operand.vmem [shape: bf16[128,128], index: 0, kind: input, shape index: {}]
  %s1 = inlined_call_operand.vmem [shape: bf16[128,128], index: 1, kind: input, shape index: {}]
  %s2 = inlined_call_operand.vmem [shape: bf16[128,128], index: 2, kind: output, shape index: {}]
  %s3 = sld [smem:[#allocation0]]
  $region41: #{unet_innermost_forward.2} parent=0
    _
  %s5 = ssub.s32 1, %s3
  %s6 = scalar_select 0, %s5, %s3
  loop: start=0, step=1, limit=4
  $region2: #{unet_innermost_forward.2} parent=0 // loop_pre_header
    _
  $region3: #{unet_innermost_forward.2} parent=0 // loop_header
    %s8 = sphi 0, %s12
    %p9 = scmp.ge.s32.totalorder %s8, 4
    %s18 = sphi 0, %s20
    %s21 = sphi 0, %s18
    %s22 = sphi 0, %s21
    %s38 = sphi 0, %s22
    %s42 = sphi 0, %s42
    %s44 = sphi 0, %s42
    %s45 = sphi 0, %s44
    %s59 = sphi 0, %s45
    %s65 = sphi 0, %s67
    %s68 = sphi 0, %s65
    %s69 = sphi 0, %s68
    %s85 = sphi 0, %s69
  $region4: #{unet_innermost_forward.2} parent=0 // loop_header_branch
    %11 = sbr.rel (%p9) target = $region8
  $region5: #{unet_innermost_forward.2} parent=0 // loop_body
    %s13 = ssub.s32 %s8, 1
    %s14 = ssub.s32 %s8, 2
    %s15 = sadd.s32 %s8, 1
    %s16 = ssub.s32 %s8, %s15
    %p17 = scmp.eq.s32.totalorder %s16, 0
    %s19 = sadd.s32 %s18, 1
    %s20 = scalar_select %p17, %s18, %s19
    %p23 = pneg %p17
    %p24 = scmp.eq.s32.totalorder %s8, 1
    %p25 = por %p23, %p24
    %p26 = scmp.ne.s32.totalorder %s18, %s21
    %p27 = scmp.eq.s32.totalorder %s8, 0
    %p28 = por %p26, %p27
    %p29 = scmp.ne.s32.totalorder %s18, %s21
    %p30 = scmp.eq.s32.totalorder %s13, 1
    %p31 = por %p29, %p30
    %p32 = scmp.ne.s32.totalorder %s21, %s22
    %p33 = scmp.eq.s32.totalorder %s13, 0
    %p34 = por %p32, %p33
    %p35 = scmp.ne.s32.totalorder %s21, %s22
    %p36 = scmp.eq.s32.totalorder %s14, 1
    %p37 = por %p35, %p36
    %p39 = scmp.ne.s32.totalorder %s22, %s38
    %p40 = scmp.eq.s32.totalorder %s14, 0
    %p41 = por %p39, %p40
    %s43 = sadd.s32 %s42, 1
    %p46 = scmp.eq.s32.totalorder %s8, 1
    %p47 = scmp.ne.s32.totalorder %s42, %s44
    %p48 = scmp.eq.s32.totalorder %s8, 0
    %p49 = por %p47, %p48
    %p50 = scmp.ne.s32.totalorder %s42, %s44
    %p51 = scmp.eq.s32.totalorder %s13, 1
    %p52 = por %p50, %p51
    %p53 = scmp.ne.s32.totalorder %s44, %s45
    %p54 = scmp.eq.s32.totalorder %s13, 0
    %p55 = por %p53, %p54
    %p56 = scmp.ne.s32.totalorder %s44, %s45
    %p57 = scmp.eq.s32.totalorder %s14, 1
    %p58 = por %p56, %p57
    %p60 = scmp.ne.s32.totalorder %s45, %s59
    %p61 = scmp.eq.s32.totalorder %s14, 0
    %p62 = por %p60, %p61
    %s63 = ssub.s32 %s8, %s15
    %p64 = scmp.eq.s32.totalorder %s63, 0
    %s66 = sadd.s32 %s65, 1
    %s67 = scalar_select %p64, %s65, %s66
    %p70 = pneg %p64
    %p71 = scmp.eq.s32.totalorder %s8, 1
    %p72 = por %p70, %p71
    %p73 = scmp.ne.s32.totalorder %s65, %s68
    %p74 = scmp.eq.s32.totalorder %s8, 0
    %p75 = por %p73, %p74
    %p76 = scmp.ne.s32.totalorder %s65, %s68
    %p77 = scmp.eq.s32.totalorder %s13, 1
    %p78 = por %p76, %p77
    %p79 = scmp.ne.s32.totalorder %s68, %s69
    %p80 = scmp.eq.s32.totalorder %s13, 0
    %p81 = por %p79, %p80
    %p82 = scmp.ne.s32.totalorder %s68, %s69
    %p83 = scmp.eq.s32.totalorder %s14, 1
    %p84 = por %p82, %p83
    %p86 = scmp.ne.s32.totalorder %s69, %s85
    %p87 = scmp.eq.s32.totalorder %s14, 0
    %p88 = por %p86, %p87
    %p89 = scmp.le.s32.totalorder 1, %s8
    %p90 = scmp.lt.s32.totalorder %s8, 3
    %p91 = pnand %p89, %p90
    %p92 = pneg %p91
    // Predicated region
    $region9: #{unet_innermost_forward.2} parent=5 // pred_check
      _
    $region10: #{unet_innermost_forward.2} parent=5 // pred_check_branch
      %94 = sbr.rel (%p91) target = $region12
    $region11: #{unet_innermost_forward.2} parent=5 // pred_region
      %s95 = ssub.s32 %s8, 1
      // Predicated region
      $region13: #{unet_innermost_forward.2} parent=11 // pred_check
        %p96 = pneg %p55
      $region14: #{unet_innermost_forward.2} parent=11 // pred_check_branch
        %98 = sbr.rel (%p96) target = $region16
      $region15: #{unet_innermost_forward.2} parent=11 // pred_region
        _
      $region16: #{unet_innermost_forward.2} parent=11 // pred_fallthru
        _
    $region12: #{unet_innermost_forward.2} parent=5 // pred_fallthru
      _
    %p99 = scmp.lt.s32.totalorder %s8, 2
    // Predicated region
    $region17: #{unet_innermost_forward.2} parent=5 // pred_check
      %p100 = pneg %p99
    $region18: #{unet_innermost_forward.2} parent=5 // pred_check_branch
      %102 = sbr.rel (%p100) target = $region20
    $region19: #{unet_innermost_forward.2} parent=5 // pred_region
      // Predicated region
      $region21: #{unet_innermost_forward.2} parent=19 // pred_check
        %p103 = pneg %p28
      $region22: #{unet_innermost_forward.2} parent=19 // pred_check_branch
        %105 = sbr.rel (%p103) target = $region24
      $region23: #{unet_innermost_forward.2} parent=19 // pred_region
        %s106 = smul.u32 8, %s8
        %p107 = scmp.lt.s32.totalorder %s106, 15
        %s108 = scalar_select %p107, %s106, 15
        %s109 = smul.addr %s108, 4
        %s110 = scalar_lea.vmem %s0, %s109
        %s111 = smul.u32 8, %s8
      $region24: #{unet_innermost_forward.2} parent=19 // pred_fallthru
        _
    $region20: #{unet_innermost_forward.2} parent=5 // pred_fallthru
      _
    %p112 = scmp.le.s32.totalorder 1, %s8
    %p113 = scmp.lt.s32.totalorder %s8, 3
    %p114 = pnand %p112, %p113
    %p115 = pneg %p114
    // Predicated region
    $region25: #{unet_innermost_forward.2} parent=5 // pred_check
      _
    $region26: #{unet_innermost_forward.2} parent=5 // pred_check_branch
      %117 = sbr.rel (%p114) target = $region28
    $region27: #{unet_innermost_forward.2} parent=5 // pred_region
      %s118 = ssub.s32 %s8, 1
      %s119 = smul.u32 8, %s13
      %p120 = scmp.lt.s32.totalorder %s119, 15
      %s121 = scalar_select %p120, %s119, 15
      %s122 = smul.addr %s121, 4
      %s123 = scalar_lea.vmem %s0, %s122
      %p124 = pneg %p34
      %p125 = pneg %p31
      %p126 = pneg %p55
      %p127 = pneg %p52
      %p128 = pneg %p81
      %p129 = pneg %p78
      %s130 = smul.u32 8, %s13
      %p131 = scmp.lt.s32.totalorder %s130, 15
      %s132 = scalar_select %p131, %s130, 15
      %s133 = smul.addr %s132, 4
      %s134 = scalar_lea.vmem %s2, %s133
      %s135 = smul.u32 8, %s13
      %p136 = scmp.lt.s32.totalorder %s135, 15
      %s137 = scalar_select %p136, %s135, 15
      %s138 = smul.addr %s137, 4
      %s139 = scalar_lea.vmem %s0, %s138
      %s140 = smul.u32 8, %s13
      %s141 = smul.u32 8, %s13
      %p142 = scmp.lt.s32.totalorder %s141, 15
      %s143 = scalar_select %p142, %s141, 15
      %s144 = smul.addr %s143, 4
      %s145 = scalar_lea.vmem %s2, %s144
      %s146 = smul.u32 8, %s13
      %v149 = vld [vmem:[%s139] sm:$0xf]
      %v150 = vld [vmem:[%s139 + $0x4] sm:$0xf]
      %v151 = vld [vmem:[%s139 + $0x8] sm:$0xf]
      %v152 = vld [vmem:[%s139 + $0xc] sm:$0xf]
      %v153 = vld [vmem:[%s139 + $0x10] sm:$0xf]
      %v154 = vld [vmem:[%s139 + $0x14] sm:$0xf]
      %v155 = vld [vmem:[%s139 + $0x18] sm:$0xf]
      %v156 = vld [vmem:[%s139 + $0x1c] sm:$0xf]
      %vm157 = vcmp.ge.bf16.partialorder %v149, 0
      %vm158 = vcmp.ge.bf16.partialorder %v150, 0
      %vm159 = vcmp.ge.bf16.partialorder %v151, 0
      %vm160 = vcmp.ge.bf16.partialorder %v152, 0
      %vm161 = vcmp.ge.bf16.partialorder %v153, 0
      %vm162 = vcmp.ge.bf16.partialorder %v154, 0
      %vm163 = vcmp.ge.bf16.partialorder %v155, 0
      %vm164 = vcmp.ge.bf16.partialorder %v156, 0
      %v165 = vmul.bf16 %v149, 1045249613
      %v166 = vmul.bf16 %v150, 1045249613
      %v167 = vmul.bf16 %v151, 1045249613
      %v168 = vmul.bf16 %v152, 1045249613
      %v169 = vmul.bf16 %v153, 1045249613
      %v170 = vmul.bf16 %v154, 1045249613
      %v171 = vmul.bf16 %v155, 1045249613
      %v172 = vmul.bf16 %v156, 1045249613
      %v173 = vsel %vm157, %v149, %v165
      %v174 = vsel %vm158, %v150, %v166
      %v175 = vsel %vm159, %v151, %v167
      %v176 = vsel %vm160, %v152, %v168
      %v177 = vsel %vm161, %v153, %v169
      %v178 = vsel %vm162, %v154, %v170
      %v179 = vsel %vm163, %v155, %v171
      %v180 = vsel %vm164, %v156, %v172
      %v181 = vld [vmem:[%s1] sm:$0xf]
      %v182 = vld [vmem:[%s1 + $0x4] sm:$0xf]
      %v183 = vld [vmem:[%s1 + $0x8] sm:$0xf]
      %v184 = vld [vmem:[%s1 + $0xc] sm:$0xf]
      %v185 = vld [vmem:[%s1 + $0x10] sm:$0xf]
      %v186 = vld [vmem:[%s1 + $0x14] sm:$0xf]
      %v187 = vld [vmem:[%s1 + $0x18] sm:$0xf]
      %v188 = vld [vmem:[%s1 + $0x1c] sm:$0xf]
      %v189 = vld [vmem:[%s1 + $0x20] sm:$0xf]
      %v190 = vld [vmem:[%s1 + $0x24] sm:$0xf]
      %v191 = vld [vmem:[%s1 + $0x28] sm:$0xf]
      %v192 = vld [vmem:[%s1 + $0x2c] sm:$0xf]
      %v193 = vld [vmem:[%s1 + $0x30] sm:$0xf]
      %v194 = vld [vmem:[%s1 + $0x34] sm:$0xf]
      %v195 = vld [vmem:[%s1 + $0x38] sm:$0xf]
      %v196 = vld [vmem:[%s1 + $0x3c] sm:$0xf]
      %v205 = vunpack.c.l.b16 %v173
      %v206 = vunpack.c.l.b16 %v174
      %v207 = vunpack.c.l.b16 %v175
      %v208 = vunpack.c.l.b16 %v176
      %v209 = vunpack.c.l.b16 %v177
      %v210 = vunpack.c.l.b16 %v178
      %v211 = vunpack.c.l.b16 %v179
      %v212 = vunpack.c.l.b16 %v180
      %v213 = vpack.c.b16 %v206, %v205
      %v214 = vpack.c.b16 %v208, %v207
      %v215 = vpack.c.b16 %v210, %v209
      %v216 = vpack.c.b16 %v212, %v211
      %v237 = vunpack.c.l.b16 %v181
      %v238 = vunpack.c.l.b16 %v182
      %v239 = vunpack.c.l.b16 %v183
      %v240 = vunpack.c.l.b16 %v184
      %v241 = vunpack.c.l.b16 %v185
      %v242 = vunpack.c.l.b16 %v186
      %v243 = vunpack.c.l.b16 %v187
      %v244 = vunpack.c.l.b16 %v188
      %v245 = vunpack.c.l.b16 %v189
      %v246 = vunpack.c.l.b16 %v190
      %v247 = vunpack.c.l.b16 %v191
      %v248 = vunpack.c.l.b16 %v192
      %v249 = vunpack.c.l.b16 %v193
      %v250 = vunpack.c.l.b16 %v194
      %v251 = vunpack.c.l.b16 %v195
      %v252 = vunpack.c.l.b16 %v196
      %v253 = vpack.c.b16 %v238, %v237
      %v254 = vpack.c.b16 %v240, %v239
      %v255 = vpack.c.b16 %v242, %v241
      %v256 = vpack.c.b16 %v244, %v243
      %v257 = vpack.c.b16 %v246, %v245
      %v258 = vpack.c.b16 %v248, %v247
      %v259 = vpack.c.b16 %v250, %v249
      %v260 = vpack.c.b16 %v252, %v251
      %269 = vmatprep.subr.bf16.mxu0 0
      %270 = vmatpush1.bf16.msra.mxu0 %v260
      %271 = vmatprep.subr.bf16.mxu0 0
      %272 = vmatpush1.bf16.msra.mxu0 %v259
      %273 = vmatprep.subr.bf16.mxu0 0
      %274 = vmatpush1.bf16.msra.mxu0 %v258
      %275 = vmatprep.subr.bf16.mxu0 0
      %276 = vmatpush1.bf16.msra.mxu0 %v257
      %277 = vmatprep.subr.bf16.mxu0 0
      %278 = vmatpush1.bf16.msra.mxu0 %v256
      %279 = vmatprep.subr.bf16.mxu0 0
      %280 = vmatpush1.bf16.msra.mxu0 %v255
      %281 = vmatprep.subr.bf16.mxu0 0
      %282 = vmatpush1.bf16.msra.mxu0 %v254
      %283 = vmatprep.subr.bf16.mxu0 0
      %284 = vmatpush1.bf16.msra.mxu0 %v253
      %285 = vmatprep.subr.bf16.mxu0 0
      %286 = vmatpush2.bf16.msra.mxu0 0
      %287 = vmatprep.subr.bf16.mxu0 0
      %288 = vmatpush2.bf16.msra.mxu0 0
      %289 = vmatprep.subr.bf16.mxu0 0
      %290 = vmatpush2.bf16.msra.mxu0 0
      %291 = vmatprep.subr.bf16.mxu0 0
      %292 = vmatpush2.bf16.msra.mxu0 0
      %293 = vmatprep.subr.bf16.mxu0 0
      %294 = vmatpush2.bf16.msra.mxu0 0
      %295 = vmatprep.subr.bf16.mxu0 0
      %296 = vmatpush2.bf16.msra.mxu0 0
      %297 = vmatprep.subr.bf16.mxu0 0
      %298 = vmatpush2.bf16.msra.mxu0 0
      %299 = vmatprep.subr.bf16.mxu0 0
      %300 = vmatpush2.bf16.msra.mxu0 0
      %301 = vmatprep.mubr.bf16.mxu0 0
      %302 = vmatmul.mubr.bf16.gmra.mxu0 %v213
      %v303 = vpop.f32.mrf.mxu0
      %v304 = vadd.f32 0.0, %v303
      %v305 = vpop.f32.mrf.mxu0
      %v306 = vpop.f32.mrf.mxu0
      %v307 = vadd.f32 0.0, %v306
      %v308 = vpop.f32.mrf.mxu0
      %309 = vmatprep.mubr.bf16.mxu0 0
      %310 = vmatmul.mubr.bf16.gmra.mxu0 %v214
      %v311 = vpop.f32.mrf.mxu0
      %v312 = vadd.f32 0.0, %v311
      %v313 = vpop.f32.mrf.mxu0
      %v314 = vpop.f32.mrf.mxu0
      %v315 = vadd.f32 0.0, %v314
      %v316 = vpop.f32.mrf.mxu0
      %317 = vmatprep.mubr.bf16.mxu0 0
      %318 = vmatmul.mubr.bf16.gmra.mxu0 %v215
      %v319 = vpop.f32.mrf.mxu0
      %v320 = vadd.f32 0.0, %v319
      %v321 = vpop.f32.mrf.mxu0
      %v322 = vpop.f32.mrf.mxu0
      %v323 = vadd.f32 0.0, %v322
      %v324 = vpop.f32.mrf.mxu0
      %325 = vmatprep.mubr.bf16.mxu0 0
      %326 = vmatmul.mubr.bf16.gmra.mxu0 %v216
      %v327 = vpop.f32.mrf.mxu0
      %v328 = vadd.f32 0.0, %v327
      %v329 = vpop.f32.mrf.mxu0
      %v330 = vpop.f32.mrf.mxu0
      %v331 = vadd.f32 0.0, %v330
      %v332 = vpop.f32.mrf.mxu0
      %333 = vdwg.mxu0
      %v334 = vpack.c.bf16 %v307, %v304
      %v335 = vpack.c.bf16 %v315, %v312
      %v336 = vpack.c.bf16 %v323, %v320
      %v337 = vpack.c.bf16 %v331, %v328
      %v342 = vunpack.c.l.b16 %v334
      %v343 = vunpack.c.h.b16 %v334
      %v344 = vunpack.c.l.b16 %v335
      %v345 = vunpack.c.h.b16 %v335
      %v346 = vunpack.c.l.b16 %v336
      %v347 = vunpack.c.h.b16 %v336
      %v348 = vunpack.c.l.b16 %v337
      %v349 = vunpack.c.h.b16 %v337
      %v350 = vpack.c.b16 %v342, %v342
      %v351 = vpack.c.b16 %v343, %v343
      %v352 = vpack.c.b16 %v344, %v344
      %v353 = vpack.c.b16 %v345, %v345
      %v354 = vpack.c.b16 %v346, %v346
      %v355 = vpack.c.b16 %v347, %v347
      %v356 = vpack.c.b16 %v348, %v348
      %v357 = vpack.c.b16 %v349, %v349
      %366 = vst [vmem:[%s145] sm:$0xf] %v350
      %367 = vst [vmem:[%s145 + $0x4] sm:$0xf] %v351
      %368 = vst [vmem:[%s145 + $0x8] sm:$0xf] %v352
      %369 = vst [vmem:[%s145 + $0xc] sm:$0xf] %v353
      %370 = vst [vmem:[%s145 + $0x10] sm:$0xf] %v354
      %371 = vst [vmem:[%s145 + $0x14] sm:$0xf] %v355
      %372 = vst [vmem:[%s145 + $0x18] sm:$0xf] %v356
      %373 = vst [vmem:[%s145 + $0x1c] sm:$0xf] %v357
      %s374 = smul.u32 8, %s13
      %p375 = scmp.lt.s32.totalorder %s374, 15
      %s376 = scalar_select %p375, %s374, 15
      %s377 = smul.addr %s376, 4
      %s378 = scalar_lea.vmem %s2, %s377
      // Predicated region
      $region29: #{unet_innermost_forward.2} parent=27 // pred_check
        %p379 = pneg %p78
      $region30: #{unet_innermost_forward.2} parent=27 // pred_check_branch
        %381 = sbr.rel (%p379) target = $region32
      $region31: #{unet_innermost_forward.2} parent=27 // pred_region
        %s382 = smul.u32 8, %s13
      $region32: #{unet_innermost_forward.2} parent=27 // pred_fallthru
        _
    $region28: #{unet_innermost_forward.2} parent=5 // pred_fallthru
      _
    %p383 = scmp.le.s32.totalorder 2, %s8
    // Predicated region
    $region33: #{unet_innermost_forward.2} parent=5 // pred_check
      %p384 = pneg %p383
    $region34: #{unet_innermost_forward.2} parent=5 // pred_check_branch
      %386 = sbr.rel (%p384) target = $region36
    $region35: #{unet_innermost_forward.2} parent=5 // pred_region
      %s387 = ssub.s32 %s8, 2
      // Predicated region
      $region37: #{unet_innermost_forward.2} parent=35 // pred_check
        %p388 = pneg %p84
      $region38: #{unet_innermost_forward.2} parent=35 // pred_check_branch
        %390 = sbr.rel (%p388) target = $region40
      $region39: #{unet_innermost_forward.2} parent=35 // pred_region
        %s391 = smul.u32 8, %s14
        %p392 = scmp.lt.s32.totalorder %s391, 15
        %s393 = scalar_select %p392, %s391, 15
        %s394 = smul.addr %s393, 4
        %s395 = scalar_lea.vmem %s2, %s394
      $region40: #{unet_innermost_forward.2} parent=35 // pred_fallthru
        _
    $region36: #{unet_innermost_forward.2} parent=5 // pred_fallthru
      _
  $region6: #{unet_innermost_forward.2} parent=0 // loop_footer
    %s12 = sadd.s32 1, %s8
  $region7: #{unet_innermost_forward.2} parent=0 // loop_footer_branch
    %7 = sbr.rel target = $region3
  $region8: #{unet_innermost_forward.2} parent=0 // loop_exit
    _

// kernel: unet_innermost_forward.3
$region0: #{unet_innermost_forward.3}
  #allocation0 [shape = 'u32[]', space=smem, size = 0x4, offset = 0x4, fixed_abs, tag = 'smem constant byte address 0x4 - core index']
  #allocation1 [shape = 'u32[144,128]{1,0:T(1,128)}', space=vmem, size = 0x12000, scoped, tag = 'internal scratch']
  %s0 = inlined_call_operand.vmem [shape: f32[176,8], index: 0, kind: input, shape index: {}]
  %s1 = inlined_call_operand.vmem [shape: bf16[176,512], index: 1, kind: input, shape index: {}]
  %s2 = inlined_call_operand.vmem [shape: bf16[512,128], index: 2, kind: input, shape index: {}]
  %s3 = inlined_call_operand.vmem [shape: bf16[176,128], index: 3, kind: output, shape index: {0}]
  %s4 = inlined_call_operand.vmem [shape: f32[2,2,128], index: 4, kind: output, shape index: {1}]
  %5 = xla_tuple %s3, %s4
  %s6 = sld [smem:[#allocation0]]
  $region53: #{unet_innermost_forward.3} parent=0
    _
  %s8 = ssub.s32 1, %s6
  %s9 = scalar_select 0, %s8, %s6
  loop: start=0, step=1, limit=4
  $region2: #{unet_innermost_forward.3} parent=0 // loop_pre_header
    _
  $region3: #{unet_innermost_forward.3} parent=0 // loop_header
    %s11 = sphi 0, %s15
    %p12 = scmp.ge.s32.totalorder %s11, 4
    %s21 = sphi 0, %s23
    %s24 = sphi 0, %s21
    %s25 = sphi 0, %s24
    %s41 = sphi 0, %s25
    %s47 = sphi 0, %s49
    %s50 = sphi 0, %s47
    %s51 = sphi 0, %s50
    %s67 = sphi 0, %s51
    %s71 = sphi 0, %s71
    %s73 = sphi 0, %s71
    %s74 = sphi 0, %s73
    %s88 = sphi 0, %s74
    %s94 = sphi 0, %s96
    %s97 = sphi 0, %s94
    %s98 = sphi 0, %s97
    %s114 = sphi 0, %s98
    %s120 = sphi 0, %s122
    %s123 = sphi 0, %s120
    %s124 = sphi 0, %s123
    %s140 = sphi 0, %s124
  $region4: #{unet_innermost_forward.3} parent=0 // loop_header_branch
    %14 = sbr.rel (%p12) target = $region8
  $region5: #{unet_innermost_forward.3} parent=0 // loop_body
    %s16 = ssub.s32 %s11, 1
    %s17 = ssub.s32 %s11, 2
    %s18 = sadd.s32 %s11, 1
    %s19 = ssub.s32 %s11, %s18
    %p20 = scmp.eq.s32.totalorder %s19, 0
    %s22 = sadd.s32 %s21, 1
    %s23 = scalar_select %p20, %s21, %s22
    %p26 = pneg %p20
    %p27 = scmp.eq.s32.totalorder %s11, 1
    %p28 = por %p26, %p27
    %p29 = scmp.ne.s32.totalorder %s21, %s24
    %p30 = scmp.eq.s32.totalorder %s11, 0
    %p31 = por %p29, %p30
    %p32 = scmp.ne.s32.totalorder %s21, %s24
    %p33 = scmp.eq.s32.totalorder %s16, 1
    %p34 = por %p32, %p33
    %p35 = scmp.ne.s32.totalorder %s24, %s25
    %p36 = scmp.eq.s32.totalorder %s16, 0
    %p37 = por %p35, %p36
    %p38 = scmp.ne.s32.totalorder %s24, %s25
    %p39 = scmp.eq.s32.totalorder %s17, 1
    %p40 = por %p38, %p39
    %p42 = scmp.ne.s32.totalorder %s25, %s41
    %p43 = scmp.eq.s32.totalorder %s17, 0
    %p44 = por %p42, %p43
    %s45 = ssub.s32 %s11, %s18
    %p46 = scmp.eq.s32.totalorder %s45, 0
    %s48 = sadd.s32 %s47, 1
    %s49 = scalar_select %p46, %s47, %s48
    %p52 = pneg %p46
    %p53 = scmp.eq.s32.totalorder %s11, 1
    %p54 = por %p52, %p53
    %p55 = scmp.ne.s32.totalorder %s47, %s50
    %p56 = scmp.eq.s32.totalorder %s11, 0
    %p57 = por %p55, %p56
    %p58 = scmp.ne.s32.totalorder %s47, %s50
    %p59 = scmp.eq.s32.totalorder %s16, 1
    %p60 = por %p58, %p59
    %p61 = scmp.ne.s32.totalorder %s50, %s51
    %p62 = scmp.eq.s32.totalorder %s16, 0
    %p63 = por %p61, %p62
    %p64 = scmp.ne.s32.totalorder %s50, %s51
    %p65 = scmp.eq.s32.totalorder %s17, 1
    %p66 = por %p64, %p65
    %p68 = scmp.ne.s32.totalorder %s51, %s67
    %p69 = scmp.eq.s32.totalorder %s17, 0
    %p70 = por %p68, %p69
    %s72 = sadd.s32 %s71, 1
    %p75 = scmp.eq.s32.totalorder %s11, 1
    %p76 = scmp.ne.s32.totalorder %s71, %s73
    %p77 = scmp.eq.s32.totalorder %s11, 0
    %p78 = por %p76, %p77
    %p79 = scmp.ne.s32.totalorder %s71, %s73
    %p80 = scmp.eq.s32.totalorder %s16, 1
    %p81 = por %p79, %p80
    %p82 = scmp.ne.s32.totalorder %s73, %s74
    %p83 = scmp.eq.s32.totalorder %s16, 0
    %p84 = por %p82, %p83
    %p85 = scmp.ne.s32.totalorder %s73, %s74
    %p86 = scmp.eq.s32.totalorder %s17, 1
    %p87 = por %p85, %p86
    %p89 = scmp.ne.s32.totalorder %s74, %s88
    %p90 = scmp.eq.s32.totalorder %s17, 0
    %p91 = por %p89, %p90
    %s92 = ssub.s32 %s11, %s18
    %p93 = scmp.eq.s32.totalorder %s92, 0
    %s95 = sadd.s32 %s94, 1
    %s96 = scalar_select %p93, %s94, %s95
    %p99 = pneg %p93
    %p100 = scmp.eq.s32.totalorder %s11, 1
    %p101 = por %p99, %p100
    %p102 = scmp.ne.s32.totalorder %s94, %s97
    %p103 = scmp.eq.s32.totalorder %s11, 0
    %p104 = por %p102, %p103
    %p105 = scmp.ne.s32.totalorder %s94, %s97
    %p106 = scmp.eq.s32.totalorder %s16, 1
    %p107 = por %p105, %p106
    %p108 = scmp.ne.s32.totalorder %s97, %s98
    %p109 = scmp.eq.s32.totalorder %s16, 0
    %p110 = por %p108, %p109
    %p111 = scmp.ne.s32.totalorder %s97, %s98
    %p112 = scmp.eq.s32.totalorder %s17, 1
    %p113 = por %p111, %p112
    %p115 = scmp.ne.s32.totalorder %s98, %s114
    %p116 = scmp.eq.s32.totalorder %s17, 0
    %p117 = por %p115, %p116
    %s118 = ssub.s32 %s11, %s18
    %p119 = scmp.eq.s32.totalorder %s118, 0
    %s121 = sadd.s32 %s120, 1
    %s122 = scalar_select %p119, %s120, %s121
    %p125 = pneg %p119
    %p126 = scmp.eq.s32.totalorder %s11, 1
    %p127 = por %p125, %p126
    %p128 = scmp.ne.s32.totalorder %s120, %s123
    %p129 = scmp.eq.s32.totalorder %s11, 0
    %p130 = por %p128, %p129
    %p131 = scmp.ne.s32.totalorder %s120, %s123
    %p132 = scmp.eq.s32.totalorder %s16, 1
    %p133 = por %p131, %p132
    %p134 = scmp.ne.s32.totalorder %s123, %s124
    %p135 = scmp.eq.s32.totalorder %s16, 0
    %p136 = por %p134, %p135
    %p137 = scmp.ne.s32.totalorder %s123, %s124
    %p138 = scmp.eq.s32.totalorder %s17, 1
    %p139 = por %p137, %p138
    %p141 = scmp.ne.s32.totalorder %s124, %s140
    %p142 = scmp.eq.s32.totalorder %s17, 0
    %p143 = por %p141, %p142
    %p144 = scmp.le.s32.totalorder 1, %s11
    %p145 = scmp.lt.s32.totalorder %s11, 3
    %p146 = pnand %p144, %p145
    %p147 = pneg %p146
    // Predicated region
    $region9: #{unet_innermost_forward.3} parent=5 // pred_check
      _
    $region10: #{unet_innermost_forward.3} parent=5 // pred_check_branch
      %149 = sbr.rel (%p146) target = $region12
    $region11: #{unet_innermost_forward.3} parent=5 // pred_region
      %s150 = ssub.s32 %s11, 1
      // Predicated region
      $region13: #{unet_innermost_forward.3} parent=11 // pred_check
        %p151 = pneg %p84
      $region14: #{unet_innermost_forward.3} parent=11 // pred_check_branch
        %153 = sbr.rel (%p151) target = $region16
      $region15: #{unet_innermost_forward.3} parent=11 // pred_region
        _
      $region16: #{unet_innermost_forward.3} parent=11 // pred_fallthru
        _
    $region12: #{unet_innermost_forward.3} parent=5 // pred_fallthru
      _
    %p154 = scmp.lt.s32.totalorder %s11, 2
    // Predicated region
    $region17: #{unet_innermost_forward.3} parent=5 // pred_check
      %p155 = pneg %p154
    $region18: #{unet_innermost_forward.3} parent=5 // pred_check_branch
      %157 = sbr.rel (%p155) target = $region20
    $region19: #{unet_innermost_forward.3} parent=5 // pred_region
      // Predicated region
      $region21: #{unet_innermost_forward.3} parent=19 // pred_check
        %p158 = pneg %p31
      $region22: #{unet_innermost_forward.3} parent=19 // pred_check_branch
        %160 = sbr.rel (%p158) target = $region24
      $region23: #{unet_innermost_forward.3} parent=19 // pred_region
        %s161 = smul.u32 11, %s11
        %p162 = scmp.lt.s32.totalorder %s161, 21
        %s163 = scalar_select %p162, %s161, 21
        %s164 = smul.addr %s163, 8
        %s165 = scalar_lea.vmem %s0, %s164
        %s166 = smul.u32 11, %s11
      $region24: #{unet_innermost_forward.3} parent=19 // pred_fallthru
        _
      // Predicated region
      $region25: #{unet_innermost_forward.3} parent=19 // pred_check
        %p167 = pneg %p57
      $region26: #{unet_innermost_forward.3} parent=19 // pred_check_branch
        %169 = sbr.rel (%p167) target = $region28
      $region27: #{unet_innermost_forward.3} parent=19 // pred_region
        %s170 = smul.u32 11, %s11
        %p171 = scmp.lt.s32.totalorder %s170, 21
        %s172 = scalar_select %p171, %s170, 21
        %s173 = smul.addr %s172, 4
        %s174 = smul.addr %s173, 4
        %s175 = scalar_lea.vmem %s1, %s174
        %s176 = smul.u32 11, %s11
      $region28: #{unet_innermost_forward.3} parent=19 // pred_fallthru
        _
    $region20: #{unet_innermost_forward.3} parent=5 // pred_fallthru
      _
    %p177 = scmp.le.s32.totalorder 1, %s11
    %p178 = scmp.lt.s32.totalorder %s11, 3
    %p179 = pnand %p177, %p178
    %p180 = pneg %p179
    // Predicated region
    $region29: #{unet_innermost_forward.3} parent=5 // pred_check
      _
    $region30: #{unet_innermost_forward.3} parent=5 // pred_check_branch
      %182 = sbr.rel (%p179) target = $region32
    $region31: #{unet_innermost_forward.3} parent=5 // pred_region
      %s183 = ssub.s32 %s11, 1
      %s184 = smul.u32 11, %s16
      %p185 = scmp.lt.s32.totalorder %s184, 21
      %s186 = scalar_select %p185, %s184, 21
      %s187 = smul.addr %s186, 8
      %s188 = scalar_lea.vmem %s0, %s187
      %p189 = pneg %p37
      %p190 = pneg %p34
      %s191 = smul.u32 11, %s16
      %p192 = scmp.lt.s32.totalorder %s191, 21
      %s193 = scalar_select %p192, %s191, 21
      %s194 = smul.addr %s193, 4
      %s195 = smul.addr %s194, 4
      %s196 = scalar_lea.vmem %s1, %s195
      %p197 = pneg %p63
      %p198 = pneg %p60
      %p199 = pneg %p84
      %p200 = pneg %p81
      %p201 = pneg %p110
      %p202 = pneg %p107
      %s203 = smul.u32 11, %s16
      %p204 = scmp.lt.s32.totalorder %s203, 21
      %s205 = scalar_select %p204, %s203, 21
      %s206 = smul.addr %s205, 4
      %s207 = scalar_lea.vmem %s3, %s206
      %p208 = pneg %p136
      %p209 = pneg %p133
      %p210 = scmp.lt.s32.totalorder %s16, 1
      %s211 = scalar_select %p210, %s16, 1
      %s212 = smul.addr %s211, 2
      %s213 = scalar_lea.vmem %s4, %s212
      %s214 = smul.u32 11, %s16
      %p215 = scmp.lt.s32.totalorder %s214, 21
      %s216 = scalar_select %p215, %s214, 21
      %s217 = smul.addr %s216, 8
      %s218 = scalar_lea.vmem %s0, %s217
      %s219 = smul.u32 11, %s16
      %s220 = smul.u32 11, %s16
      %p221 = scmp.lt.s32.totalorder %s220, 21
      %s222 = scalar_select %p221, %s220, 21
      %s223 = smul.addr %s222, 4
      %s224 = smul.addr %s223, 4
      %s225 = scalar_lea.vmem %s1, %s224
      %s226 = smul.u32 11, %s16
      %s227 = smul.u32 11, %s16
      %p228 = scmp.lt.s32.totalorder %s227, 21
      %s229 = scalar_select %p228, %s227, 21
      %s230 = smul.addr %s229, 4
      %s231 = scalar_lea.vmem %s3, %s230
      %s232 = smul.u32 11, %s16
      %p233 = scmp.lt.s32.totalorder %s16, 1
      %s234 = scalar_select %p233, %s16, 1
      %s235 = smul.addr %s234, 2
      %s236 = scalar_lea.vmem %s4, %s235
      %v238 = vld [vmem:[%s225] sm:$0xff]
      %v239 = vld [vmem:[%s225 + $0x8] sm:$0xff]
      %v240 = vld [vmem:[%s225 + $0x10] sm:$0xff]
      %v241 = vld [vmem:[%s225 + $0x18] sm:$0xff]
      %v242 = vld [vmem:[%s225 + $0x20] sm:$0xff]
      %v243 = vld [vmem:[%s225 + $0x28] sm:$0xff]
      %v244 = vld [vmem:[%s225 + $0x30] sm:$0xff]
      %v245 = vld [vmem:[%s225 + $0x38] sm:$0xff]
      %v246 = vld [vmem:[%s225 + $0x40] sm:$0xff]
      %v247 = vld [vmem:[%s225 + $0x48] sm:$0xff]
      %v248 = vld [vmem:[%s225 + $0x50] sm:$0xff]
      %v249 = vld [vmem:[%s225 + $0x58] sm:$0xff]
      %v250 = vld [vmem:[%s225 + $0x60] sm:$0xff]
      %v251 = vld [vmem:[%s225 + $0x68] sm:$0xff]
      %v252 = vld [vmem:[%s225 + $0x70] sm:$0xff]
      %v253 = vld [vmem:[%s225 + $0x78] sm:$0xff]
      %v254 = vld [vmem:[%s225 + $0x80] sm:$0xff]
      %v255 = vld [vmem:[%s225 + $0x88] sm:$0xff]
      %v256 = vld [vmem:[%s225 + $0x90] sm:$0xff]
      %v257 = vld [vmem:[%s225 + $0x98] sm:$0xff]
      %v258 = vld [vmem:[%s225 + $0xa0] sm:$0xff]
      %v259 = vld [vmem:[%s225 + $0xa8] sm:$0xff]
      %v260 = vmax.bf16 %v238, 0
      %v261 = vmax.bf16 %v239, 0
      %v262 = vmax.bf16 %v240, 0
      %v263 = vmax.bf16 %v241, 0
      %v264 = vmax.bf16 %v242, 0
      %v265 = vmax.bf16 %v243, 0
      %v266 = vmax.bf16 %v244, 0
      %v267 = vmax.bf16 %v245, 0
      %v268 = vmax.bf16 %v246, 0
      %v269 = vmax.bf16 %v247, 0
      %v270 = vmax.bf16 %v248, 0
      %v271 = vmax.bf16 %v249, 0
      %v272 = vmax.bf16 %v250, 0
      %v273 = vmax.bf16 %v251, 0
      %v274 = vmax.bf16 %v252, 0
      %v275 = vmax.bf16 %v253, 0
      %v276 = vmax.bf16 %v254, 0
      %v277 = vmax.bf16 %v255, 0
      %v278 = vmax.bf16 %v256, 0
      %v279 = vmax.bf16 %v257, 0
      %v280 = vmax.bf16 %v258, 0
      %v281 = vmax.bf16 %v259, 0
      %v282 = vld [vmem:[%s2] sm:$0xf]
      %v283 = vld [vmem:[%s2 + $0x4] sm:$0xf]
      %v284 = vld [vmem:[%s2 + $0x8] sm:$0xf]
      %v285 = vld [vmem:[%s2 + $0xc] sm:$0xf]
      %v286 = vld [vmem:[%s2 + $0x10] sm:$0xf]
      %v287 = vld [vmem:[%s2 + $0x14] sm:$0xf]
      %v288 = vld [vmem:[%s2 + $0x18] sm:$0xf]
      %v289 = vld [vmem:[%s2 + $0x1c] sm:$0xf]
      %v290 = vld [vmem:[%s2 + $0x20] sm:$0xf]
      %v291 = vld [vmem:[%s2 + $0x24] sm:$0xf]
      %v292 = vld [vmem:[%s2 + $0x28] sm:$0xf]
      %v293 = vld [vmem:[%s2 + $0x2c] sm:$0xf]
      %v294 = vld [vmem:[%s2 + $0x30] sm:$0xf]
      %v295 = vld [vmem:[%s2 + $0x34] sm:$0xf]
      %v296 = vld [vmem:[%s2 + $0x38] sm:$0xf]
      %v297 = vld [vmem:[%s2 + $0x3c] sm:$0xf]
      %v298 = vld [vmem:[%s2 + $0x40] sm:$0xf]
      %v299 = vld [vmem:[%s2 + $0x44] sm:$0xf]
      %v300 = vld [vmem:[%s2 + $0x48] sm:$0xf]
      %v301 = vld [vmem:[%s2 + $0x4c] sm:$0xf]
      %v302 = vld [vmem:[%s2 + $0x50] sm:$0xf]
      %v303 = vld [vmem:[%s2 + $0x54] sm:$0xf]
      %v304 = vld [vmem:[%s2 + $0x58] sm:$0xf]
      %v305 = vld [vmem:[%s2 + $0x5c] sm:$0xf]
      %v306 = vld [vmem:[%s2 + $0x60] sm:$0xf]
      %v307 = vld [vmem:[%s2 + $0x64] sm:$0xf]
      %v308 = vld [vmem:[%s2 + $0x68] sm:$0xf]
      %v309 = vld [vmem:[%s2 + $0x6c] sm:$0xf]
      %v310 = vld [vmem:[%s2 + $0x70] sm:$0xf]
      %v311 = vld [vmem:[%s2 + $0x74] sm:$0xf]
      %v312 = vld [vmem:[%s2 + $0x78] sm:$0xf]
      %v313 = vld [vmem:[%s2 + $0x7c] sm:$0xf]
      %v314 = vld [vmem:[%s2 + $0x80] sm:$0xf]
      %v315 = vld [vmem:[%s2 + $0x84] sm:$0xf]
      %v316 = vld [vmem:[%s2 + $0x88] sm:$0xf]
      %v317 = vld [vmem:[%s2 + $0x8c] sm:$0xf]
      %v318 = vld [vmem:[%s2 + $0x90] sm:$0xf]
      %v319 = vld [vmem:[%s2 + $0x94] sm:$0xf]
      %v320 = vld [vmem:[%s2 + $0x98] sm:$0xf]
      %v321 = vld [vmem:[%s2 + $0x9c] sm:$0xf]
      %v322 = vld [vmem:[%s2 + $0xa0] sm:$0xf]
      %v323 = vld [vmem:[%s2 + $0xa4] sm:$0xf]
      %v324 = vld [vmem:[%s2 + $0xa8] sm:$0xf]
      %v325 = vld [vmem:[%s2 + $0xac] sm:$0xf]
      %v326 = vld [vmem:[%s2 + $0xb0] sm:$0xf]
      %v327 = vld [vmem:[%s2 + $0xb4] sm:$0xf]
      %v328 = vld [vmem:[%s2 + $0xb8] sm:$0xf]
      %v329 = vld [vmem:[%s2 + $0xbc] sm:$0xf]
      %v330 = vld [vmem:[%s2 + $0xc0] sm:$0xf]
      %v331 = vld [vmem:[%s2 + $0xc4] sm:$0xf]
      %v332 = vld [vmem:[%s2 + $0xc8] sm:$0xf]
      %v333 = vld [vmem:[%s2 + $0xcc] sm:$0xf]
      %v334 = vld [vmem:[%s2 + $0xd0] sm:$0xf]
      %v335 = vld [vmem:[%s2 + $0xd4] sm:$0xf]
      %v336 = vld [vmem:[%s2 + $0xd8] sm:$0xf]
      %v337 = vld [vmem:[%s2 + $0xdc] sm:$0xf]
      %v338 = vld [vmem:[%s2 + $0xe0] sm:$0xf]
      %v339 = vld [vmem:[%s2 + $0xe4] sm:$0xf]
      %v340 = vld [vmem:[%s2 + $0xe8] sm:$0xf]
      %v341 = vld [vmem:[%s2 + $0xec] sm:$0xf]
      %v342 = vld [vmem:[%s2 + $0xf0] sm:$0xf]
      %v343 = vld [vmem:[%s2 + $0xf4] sm:$0xf]
      %v344 = vld [vmem:[%s2 + $0xf8] sm:$0xf]
      %v345 = vld [vmem:[%s2 + $0xfc] sm:$0xf]
      %v368 = vunpack.c.l.b16 %v260
      %v369 = vunpack.c.h.b16 %v260
      %v370 = vunpack.c.l.b16 %v261
      %v371 = vunpack.c.h.b16 %v261
      %v372 = vunpack.c.l.b16 %v262
      %v373 = vunpack.c.h.b16 %v262
      %v374 = vunpack.c.l.b16 %v263
      %v375 = vunpack.c.h.b16 %v263
      %v376 = vunpack.c.l.b16 %v264
      %v377 = vunpack.c.h.b16 %v264
      %v378 = vunpack.c.l.b16 %v265
      %v379 = vunpack.c.h.b16 %v265
      %v380 = vunpack.c.l.b16 %v266
      %v381 = vunpack.c.h.b16 %v266
      %v382 = vunpack.c.l.b16 %v267
      %v383 = vunpack.c.h.b16 %v267
      %v384 = vunpack.c.l.b16 %v268
      %v385 = vunpack.c.h.b16 %v268
      %v386 = vunpack.c.l.b16 %v269
      %v387 = vunpack.c.h.b16 %v269
      %v388 = vunpack.c.l.b16 %v270
      %v389 = vunpack.c.h.b16 %v270
      %v390 = vunpack.c.l.b16 %v271
      %v391 = vunpack.c.h.b16 %v271
      %v392 = vunpack.c.l.b16 %v272
      %v393 = vunpack.c.h.b16 %v272
      %v394 = vunpack.c.l.b16 %v273
      %v395 = vunpack.c.h.b16 %v273
      %v396 = vunpack.c.l.b16 %v274
      %v397 = vunpack.c.h.b16 %v274
      %v398 = vunpack.c.l.b16 %v275
      %v399 = vunpack.c.h.b16 %v275
      %v400 = vunpack.c.l.b16 %v276
      %v401 = vunpack.c.h.b16 %v276
      %v402 = vunpack.c.l.b16 %v277
      %v403 = vunpack.c.h.b16 %v277
      %v404 = vunpack.c.l.b16 %v278
      %v405 = vunpack.c.h.b16 %v278
      %v406 = vunpack.c.l.b16 %v279
      %v407 = vunpack.c.h.b16 %v279
      %v408 = vunpack.c.l.b16 %v280
      %v409 = vunpack.c.h.b16 %v280
      %v410 = vunpack.c.l.b16 %v281
      %v411 = vunpack.c.h.b16 %v281
      %v412 = vpack.c.b16 %v372, %v368
      %v413 = vpack.c.b16 %v373, %v369
      %v414 = vpack.c.b16 %v374, %v370
      %v415 = vpack.c.b16 %v375, %v371
      %v416 = vpack.c.b16 %v380, %v376
      %v417 = vpack.c.b16 %v381, %v377
      %v418 = vpack.c.b16 %v382, %v378
      %v419 = vpack.c.b16 %v383, %v379
      %v420 = vpack.c.b16 %v388, %v384
      %v421 = vpack.c.b16 %v389, %v385
      %v422 = vpack.c.b16 %v390, %v386
      %v423 = vpack.c.b16 %v391, %v387
      %v424 = vpack.c.b16 %v396, %v392
      %v425 = vpack.c.b16 %v397, %v393
      %v426 = vpack.c.b16 %v398, %v394
      %v427 = vpack.c.b16 %v399, %v395
      %v428 = vpack.c.b16 %v404, %v400
      %v429 = vpack.c.b16 %v405, %v401
      %v430 = vpack.c.b16 %v406, %v402
      %v431 = vpack.c.b16 %v407, %v403
      %v432 = vpack.c.b16 %v408, %v408
      %v433 = vpack.c.b16 %v409, %v409
      %v434 = vpack.c.b16 %v410, %v410
      %v435 = vpack.c.b16 %v411, %v411
      %v524 = vunpack.c.l.b16 %v282
      %v525 = vunpack.c.l.b16 %v283
      %v526 = vunpack.c.l.b16 %v284
      %v527 = vunpack.c.l.b16 %v285
      %v528 = vunpack.c.l.b16 %v286
      %v529 = vunpack.c.l.b16 %v287
      %v530 = vunpack.c.l.b16 %v288
      %v531 = vunpack.c.l.b16 %v289
      %v532 = vunpack.c.l.b16 %v290
      %v533 = vunpack.c.l.b16 %v291
      %v534 = vunpack.c.l.b16 %v292
      %v535 = vunpack.c.l.b16 %v293
      %v536 = vunpack.c.l.b16 %v294
      %v537 = vunpack.c.l.b16 %v295
      %v538 = vunpack.c.l.b16 %v296
      %v539 = vunpack.c.l.b16 %v297
      %v540 = vunpack.c.l.b16 %v298
      %v541 = vunpack.c.l.b16 %v299
      %v542 = vunpack.c.l.b16 %v300
      %v543 = vunpack.c.l.b16 %v301
      %v544 = vunpack.c.l.b16 %v302
      %v545 = vunpack.c.l.b16 %v303
      %v546 = vunpack.c.l.b16 %v304
      %v547 = vunpack.c.l.b16 %v305
      %v548 = vunpack.c.l.b16 %v306
      %v549 = vunpack.c.l.b16 %v307
      %v550 = vunpack.c.l.b16 %v308
      %v551 = vunpack.c.l.b16 %v309
      %v552 = vunpack.c.l.b16 %v310
      %v553 = vunpack.c.l.b16 %v311
      %v554 = vunpack.c.l.b16 %v312
      %v555 = vunpack.c.l.b16 %v313
      %v556 = vunpack.c.l.b16 %v314
      %v557 = vunpack.c.l.b16 %v315
      %v558 = vunpack.c.l.b16 %v316
      %v559 = vunpack.c.l.b16 %v317
      %v560 = vunpack.c.l.b16 %v318
      %v561 = vunpack.c.l.b16 %v319
      %v562 = vunpack.c.l.b16 %v320
      %v563 = vunpack.c.l.b16 %v321
      %v564 = vunpack.c.l.b16 %v322
      %v565 = vunpack.c.l.b16 %v323
      %v566 = vunpack.c.l.b16 %v324
      %v567 = vunpack.c.l.b16 %v325
      %v568 = vunpack.c.l.b16 %v326
      %v569 = vunpack.c.l.b16 %v327
      %v570 = vunpack.c.l.b16 %v328
      %v571 = vunpack.c.l.b16 %v329
      %v572 = vunpack.c.l.b16 %v330
      %v573 = vunpack.c.l.b16 %v331
      %v574 = vunpack.c.l.b16 %v332
      %v575 = vunpack.c.l.b16 %v333
      %v576 = vunpack.c.l.b16 %v334
      %v577 = vunpack.c.l.b16 %v335
      %v578 = vunpack.c.l.b16 %v336
      %v579 = vunpack.c.l.b16 %v337
      %v580 = vunpack.c.l.b16 %v338
      %v581 = vunpack.c.l.b16 %v339
      %v582 = vunpack.c.l.b16 %v340
      %v583 = vunpack.c.l.b16 %v341
      %v584 = vunpack.c.l.b16 %v342
      %v585 = vunpack.c.l.b16 %v343
      %v586 = vunpack.c.l.b16 %v344
      %v587 = vunpack.c.l.b16 %v345
      %v588 = vpack.c.b16 %v525, %v524
      %v589 = vpack.c.b16 %v527, %v526
      %v590 = vpack.c.b16 %v529, %v528
      %v591 = vpack.c.b16 %v531, %v530
      %v592 = vpack.c.b16 %v533, %v532
      %v593 = vpack.c.b16 %v535, %v534
      %v594 = vpack.c.b16 %v537, %v536
      %v595 = vpack.c.b16 %v539, %v538
      %v596 = vpack.c.b16 %v541, %v540
      %v597 = vpack.c.b16 %v543, %v542
      %v598 = vpack.c.b16 %v545, %v544
      %v599 = vpack.c.b16 %v547, %v546
      %v600 = vpack.c.b16 %v549, %v548
      %v601 = vpack.c.b16 %v551, %v550
      %v602 = vpack.c.b16 %v553, %v552
      %v603 = vpack.c.b16 %v555, %v554
      %v604 = vpack.c.b16 %v557, %v556
      %v605 = vpack.c.b16 %v559, %v558
      %v606 = vpack.c.b16 %v561, %v560
      %v607 = vpack.c.b16 %v563, %v562
      %v608 = vpack.c.b16 %v565, %v564
      %v609 = vpack.c.b16 %v567, %v566
      %v610 = vpack.c.b16 %v569, %v568
      %v611 = vpack.c.b16 %v571, %v570
      %v612 = vpack.c.b16 %v573, %v572
      %v613 = vpack.c.b16 %v575, %v574
      %v614 = vpack.c.b16 %v577, %v576
      %v615 = vpack.c.b16 %v579, %v578
      %v616 = vpack.c.b16 %v581, %v580
      %v617 = vpack.c.b16 %v583, %v582
      %v618 = vpack.c.b16 %v585, %v584
      %v619 = vpack.c.b16 %v587, %v586
      %652 = vmatprep.subr.bf16.mxu0 0
      %653 = vmatpush1.bf16.msra.mxu0 %v595
      %654 = vmatprep.subr.bf16.mxu0 0
      %655 = vmatpush1.bf16.msra.mxu0 %v594
      %656 = vmatprep.subr.bf16.mxu0 0
      %657 = vmatpush1.bf16.msra.mxu0 %v593
      %658 = vmatprep.subr.bf16.mxu0 0
      %659 = vmatpush1.bf16.msra.mxu0 %v592
      %660 = vmatprep.subr.bf16.mxu0 0
      %661 = vmatpush1.bf16.msra.mxu0 %v591
      %662 = vmatprep.subr.bf16.mxu0 0
      %663 = vmatpush1.bf16.msra.mxu0 %v590
      %664 = vmatprep.subr.bf16.mxu0 0
      %665 = vmatpush1.bf16.msra.mxu0 %v589
      %666 = vmatprep.subr.bf16.mxu0 0
      %667 = vmatpush1.bf16.msra.mxu0 %v588
      %668 = vmatprep.subr.bf16.mxu0 0
      %669 = vmatpush2.bf16.msra.mxu0 %v603
      %670 = vmatprep.subr.bf16.mxu0 0
      %671 = vmatpush2.bf16.msra.mxu0 %v602
      %672 = vmatprep.subr.bf16.mxu0 0
      %673 = vmatpush2.bf16.msra.mxu0 %v601
      %674 = vmatprep.subr.bf16.mxu0 0
      %675 = vmatpush2.bf16.msra.mxu0 %v600
      %676 = vmatprep.subr.bf16.mxu0 0
      %677 = vmatpush2.bf16.msra.mxu0 %v599
      %678 = vmatprep.subr.bf16.mxu0 0
      %679 = vmatpush2.bf16.msra.mxu0 %v598
      %680 = vmatprep.subr.bf16.mxu0 0
      %681 = vmatpush2.bf16.msra.mxu0 %v597
      %682 = vmatprep.subr.bf16.mxu0 0
      %683 = vmatpush2.bf16.msra.mxu0 %v596
      %684 = vmatprep.mubr.bf16.mxu0 %v413
      %685 = vmatmul.mubr.bf16.gmra.mxu0 %v412
      %v686 = vpop.f32.mrf.mxu0
      %v687 = vadd.f32 0.0, %v686
      %v688 = vpop.f32.mrf.mxu0
      %v689 = vpop.f32.mrf.mxu0
      %v690 = vadd.f32 0.0, %v689
      %v691 = vpop.f32.mrf.mxu0
      %692 = vmatprep.mubr.bf16.mxu0 %v417
      %693 = vmatmul.mubr.bf16.gmra.mxu0 %v416
      %v694 = vpop.f32.mrf.mxu0
      %v695 = vadd.f32 0.0, %v694
      %v696 = vpop.f32.mrf.mxu0
      %v697 = vpop.f32.mrf.mxu0
      %v698 = vadd.f32 0.0, %v697
      %v699 = vpop.f32.mrf.mxu0
      %700 = vmatprep.mubr.bf16.mxu0 %v421
      %701 = vmatmul.mubr.bf16.gmra.mxu0 %v420
      %v702 = vpop.f32.mrf.mxu0
      %v703 = vadd.f32 0.0, %v702
      %v704 = vpop.f32.mrf.mxu0
      %v705 = vpop.f32.mrf.mxu0
      %v706 = vadd.f32 0.0, %v705
      %v707 = vpop.f32.mrf.mxu0
      %708 = vmatprep.mubr.bf16.mxu0 %v425
      %709 = vmatmul.mubr.bf16.gmra.mxu0 %v424
      %v710 = vpop.f32.mrf.mxu0
      %v711 = vadd.f32 0.0, %v710
      %v712 = vpop.f32.mrf.mxu0
      %v713 = vpop.f32.mrf.mxu0
      %v714 = vadd.f32 0.0, %v713
      %v715 = vpop.f32.mrf.mxu0
      %716 = vmatprep.mubr.bf16.mxu0 %v429
      %717 = vmatmul.mubr.bf16.gmra.mxu0 %v428
      %v718 = vpop.f32.mrf.mxu0
      %v719 = vadd.f32 0.0, %v718
      %v720 = vpop.f32.mrf.mxu0
      %v721 = vpop.f32.mrf.mxu0
      %v722 = vadd.f32 0.0, %v721
      %v723 = vpop.f32.mrf.mxu0
      %724 = vmatprep.mubr.bf16.mxu0 %v433
      %725 = vmatmul.mubr.bf16.gmra.mxu0 %v432
      %v726 = vpop.f32.mrf.mxu0
      %v727 = vadd.f32 0.0, %v726
      %v728 = vpop.f32.mrf.mxu0
      %v729 = vpop.f32.mrf.mxu0
      %v730 = vpop.f32.mrf.mxu0
      %731 = vdwg.mxu0
      %732 = vmatprep.subr.bf16.mxu0 0
      %733 = vmatpush1.bf16.msra.mxu0 %v611
      %734 = vmatprep.subr.bf16.mxu0 0
      %735 = vmatpush1.bf16.msra.mxu0 %v610
      %736 = vmatprep.subr.bf16.mxu0 0
      %737 = vmatpush1.bf16.msra.mxu0 %v609
      %738 = vmatprep.subr.bf16.mxu0 0
      %739 = vmatpush1.bf16.msra.mxu0 %v608
      %740 = vmatprep.subr.bf16.mxu0 0
      %741 = vmatpush1.bf16.msra.mxu0 %v607
      %742 = vmatprep.subr.bf16.mxu0 0
      %743 = vmatpush1.bf16.msra.mxu0 %v606
      %744 = vmatprep.subr.bf16.mxu0 0
      %745 = vmatpush1.bf16.msra.mxu0 %v605
      %746 = vmatprep.subr.bf16.mxu0 0
      %747 = vmatpush1.bf16.msra.mxu0 %v604
      %748 = vmatprep.subr.bf16.mxu0 0
      %749 = vmatpush2.bf16.msra.mxu0 %v619
      %750 = vmatprep.subr.bf16.mxu0 0
      %751 = vmatpush2.bf16.msra.mxu0 %v618
      %752 = vmatprep.subr.bf16.mxu0 0
      %753 = vmatpush2.bf16.msra.mxu0 %v617
      %754 = vmatprep.subr.bf16.mxu0 0
      %755 = vmatpush2.bf16.msra.mxu0 %v616
      %756 = vmatprep.subr.bf16.mxu0 0
      %757 = vmatpush2.bf16.msra.mxu0 %v615
      %758 = vmatprep.subr.bf16.mxu0 0
      %759 = vmatpush2.bf16.msra.mxu0 %v614
      %760 = vmatprep.subr.bf16.mxu0 0
      %761 = vmatpush2.bf16.msra.mxu0 %v613
      %762 = vmatprep.subr.bf16.mxu0 0
      %763 = vmatpush2.bf16.msra.mxu0 %v612
      %764 = vmatprep.mubr.bf16.mxu0 %v415
      %765 = vmatmul.mubr.bf16.gmra.mxu0 %v414
      %v766 = vpop.f32.mrf.mxu0
      %v767 = vadd.f32 %v687, %v766
      %v768 = vpop.f32.mrf.mxu0
      %v769 = vpop.f32.mrf.mxu0
      %v770 = vadd.f32 %v690, %v769
      %v771 = vpop.f32.mrf.mxu0
      %772 = vmatprep.mubr.bf16.mxu0 %v419
      %773 = vmatmul.mubr.bf16.gmra.mxu0 %v418
      %v774 = vpop.f32.mrf.mxu0
      %v775 = vadd.f32 %v695, %v774
      %v776 = vpop.f32.mrf.mxu0
      %v777 = vpop.f32.mrf.mxu0
      %v778 = vadd.f32 %v698, %v777
      %v779 = vpop.f32.mrf.mxu0
      %780 = vmatprep.mubr.bf16.mxu0 %v423
      %781 = vmatmul.mubr.bf16.gmra.mxu0 %v422
      %v782 = vpop.f32.mrf.mxu0
      %v783 = vadd.f32 %v703, %v782
      %v784 = vpop.f32.mrf.mxu0
      %v785 = vpop.f32.mrf.mxu0
      %v786 = vadd.f32 %v706, %v785
      %v787 = vpop.f32.mrf.mxu0
      %788 = vmatprep.mubr.bf16.mxu0 %v427
      %789 = vmatmul.mubr.bf16.gmra.mxu0 %v426
      %v790 = vpop.f32.mrf.mxu0
      %v791 = vadd.f32 %v711, %v790
      %v792 = vpop.f32.mrf.mxu0
      %v793 = vpop.f32.mrf.mxu0
      %v794 = vadd.f32 %v714, %v793
      %v795 = vpop.f32.mrf.mxu0
      %796 = vmatprep.mubr.bf16.mxu0 %v431
      %797 = vmatmul.mubr.bf16.gmra.mxu0 %v430
      %v798 = vpop.f32.mrf.mxu0
      %v799 = vadd.f32 %v719, %v798
      %v800 = vpop.f32.mrf.mxu0
      %v801 = vpop.f32.mrf.mxu0
      %v802 = vadd.f32 %v722, %v801
      %v803 = vpop.f32.mrf.mxu0
      %804 = vmatprep.mubr.bf16.mxu0 %v435
      %805 = vmatmul.mubr.bf16.gmra.mxu0 %v434
      %v806 = vpop.f32.mrf.mxu0
      %v807 = vadd.f32 %v727, %v806
      %v808 = vpop.f32.mrf.mxu0
      %v809 = vpop.f32.mrf.mxu0
      %v810 = vpop.f32.mrf.mxu0
      %811 = vdwg.mxu0
      %v812 = vpack.c.bf16 %v770, %v767
      %v813 = vpack.c.bf16 %v778, %v775
      %v814 = vpack.c.bf16 %v786, %v783
      %v815 = vpack.c.bf16 %v794, %v791
      %v816 = vpack.c.bf16 %v802, %v799
      %v817 = vpack.c.bf16 %v807, %v807
      %v824 = vunpack.c.l.b16 %v812
      %v825 = vunpack.c.h.b16 %v812
      %v826 = vunpack.c.l.b16 %v813
      %v827 = vunpack.c.h.b16 %v813
      %v828 = vunpack.c.l.b16 %v814
      %v829 = vunpack.c.h.b16 %v814
      %v830 = vunpack.c.l.b16 %v815
      %v831 = vunpack.c.h.b16 %v815
      %v832 = vunpack.c.l.b16 %v816
      %v833 = vunpack.c.h.b16 %v816
      %v834 = vunpack.c.l.b16 %v817
      %v835 = vpack.c.b16 %v824, %v824
      %v836 = vpack.c.b16 %v825, %v825
      %v837 = vpack.c.b16 %v826, %v826
      %v838 = vpack.c.b16 %v827, %v827
      %v839 = vpack.c.b16 %v828, %v828
      %v840 = vpack.c.b16 %v829, %v829
      %v841 = vpack.c.b16 %v830, %v830
      %v842 = vpack.c.b16 %v831, %v831
      %v843 = vpack.c.b16 %v832, %v832
      %v844 = vpack.c.b16 %v833, %v833
      %v845 = vpack.c.b16 %v834, %v834
      %857 = vst [vmem:[%s231] sm:$0xf] %v835
      %858 = vst [vmem:[%s231 + $0x4] sm:$0xf] %v836
      %859 = vst [vmem:[%s231 + $0x8] sm:$0xf] %v837
      %860 = vst [vmem:[%s231 + $0xc] sm:$0xf] %v838
      %861 = vst [vmem:[%s231 + $0x10] sm:$0xf] %v839
      %862 = vst [vmem:[%s231 + $0x14] sm:$0xf] %v840
      %863 = vst [vmem:[%s231 + $0x18] sm:$0xf] %v841
      %864 = vst [vmem:[%s231 + $0x1c] sm:$0xf] %v842
      %865 = vst [vmem:[%s231 + $0x20] sm:$0xf] %v843
      %866 = vst [vmem:[%s231 + $0x24] sm:$0xf] %v844
      %867 = vst [vmem:[%s231 + $0x28] sm:$0xf] %v845
      %v868 = vld [vmem:[%s218] sm:$0xff]
      %v869 = vld [vmem:[%s218 + $0x8] sm:$0xff]
      %v870 = vld [vmem:[%s218 + $0x10] sm:$0xff]
      %v871 = vld [vmem:[%s218 + $0x18] sm:$0xff]
      %v872 = vld [vmem:[%s218 + $0x20] sm:$0xff]
      %v873 = vld [vmem:[%s218 + $0x28] sm:$0xff]
      %v874 = vld [vmem:[%s218 + $0x30] sm:$0xff]
      %v875 = vld [vmem:[%s218 + $0x38] sm:$0xff]
      %v876 = vld [vmem:[%s218 + $0x40] sm:$0xff]
      %v877 = vld [vmem:[%s218 + $0x48] sm:$0xff]
      %v878 = vld [vmem:[%s218 + $0x50] sm:$0xff]
      %v879 = vlaneseq
      %v880 = vand.u32 %v879, 127
      %vm881 = vcmp.ge.s32.totalorder %v880, 4
      %v882 = vsel %vm881, 1, 0
      %vm883 = vcmp.ge.s32.totalorder %v880, 8
      %v884 = vsel %vm883, 1, 0
      %v885 = vadd.s32 %v882, %v884
      %vm886 = vcmp.ge.s32.totalorder %v880, 12
      %v887 = vsel %vm886, 1, 0
      %v888 = vadd.s32 %v885, %v887
      %vm889 = vcmp.ge.s32.totalorder %v888, 2
      %vm890 = vcmp.eq.s32.totalorder %v888, 1
      %vm891 = vcmp.eq.s32.totalorder %v888, 3
      %vm892 = vmor %vm890, %vm891
      %v893 = vsel %vm889, 1, 0
      %vm894 = vcmp.eq.s32.totalorder %v893, 1
      %896 = vset.pattern.permute.xlu0 2
      %897 = vperm.xlu0 %896, %v868
      %v898 = vpop.permute.xlu0 %897
      %901 = vset.pattern.permute.xlu0 2
      %902 = vperm.xlu0 %901, %v869
      %v903 = vpop.permute.xlu0 %902
      %906 = vset.pattern.permute.xlu0 2
      %907 = vperm.xlu0 %906, %v870
      %v908 = vpop.permute.xlu0 %907
      %911 = vset.pattern.permute.xlu0 2
      %912 = vperm.xlu0 %911, %v871
      %v913 = vpop.permute.xlu0 %912
      %916 = vset.pattern.permute.xlu0 2
      %917 = vperm.xlu0 %916, %v872
      %v918 = vpop.permute.xlu0 %917
      %921 = vset.pattern.permute.xlu0 2
      %922 = vperm.xlu0 %921, %v873
      %v923 = vpop.permute.xlu0 %922
      %926 = vset.pattern.permute.xlu0 2
      %927 = vperm.xlu0 %926, %v874
      %v928 = vpop.permute.xlu0 %927
      %931 = vset.pattern.permute.xlu0 2
      %932 = vperm.xlu0 %931, %v875
      %v933 = vpop.permute.xlu0 %932
      %936 = vset.pattern.permute.xlu0 2
      %937 = vperm.xlu0 %936, %v876
      %v938 = vpop.permute.xlu0 %937
      %941 = vset.pattern.permute.xlu0 2
      %942 = vperm.xlu0 %941, %v877
      %v943 = vpop.permute.xlu0 %942
      %946 = vset.pattern.permute.xlu0 2
      %947 = vperm.xlu0 %946, %v878
      %v948 = vpop.permute.xlu0 %947
      %950 = vset.pattern.permute.xlu0 1
      %951 = vperm.xlu0 %950, %v868
      %v952 = vpop.permute.xlu0 %951
      %954 = vset.pattern.permute.xlu0 1
      %955 = vperm.xlu0 %954, %v869
      %v956 = vpop.permute.xlu0 %955
      %958 = vset.pattern.permute.xlu0 1
      %959 = vperm.xlu0 %958, %v870
      %v960 = vpop.permute.xlu0 %959
      %962 = vset.pattern.permute.xlu0 1
      %963 = vperm.xlu0 %962, %v871
      %v964 = vpop.permute.xlu0 %963
      %966 = vset.pattern.permute.xlu0 1
      %967 = vperm.xlu0 %966, %v872
      %v968 = vpop.permute.xlu0 %967
      %970 = vset.pattern.permute.xlu0 1
      %971 = vperm.xlu0 %970, %v873
      %v972 = vpop.permute.xlu0 %971
      %974 = vset.pattern.permute.xlu0 1
      %975 = vperm.xlu0 %974, %v874
      %v976 = vpop.permute.xlu0 %975
      %978 = vset.pattern.permute.xlu0 1
      %979 = vperm.xlu0 %978, %v875
      %v980 = vpop.permute.xlu0 %979
      %982 = vset.pattern.permute.xlu0 1
      %983 = vperm.xlu0 %982, %v876
      %v984 = vpop.permute.xlu0 %983
      %986 = vset.pattern.permute.xlu0 1
      %987 = vperm.xlu0 %986, %v877
      %v988 = vpop.permute.xlu0 %987
      %990 = vset.pattern.permute.xlu0 1
      %991 = vperm.xlu0 %990, %v878
      %v992 = vpop.permute.xlu0 %991
      %v994 = vsel %vm894, %v898, %v952
      %v995 = vsel %vm894, %v903, %v956
      %v996 = vsel %vm894, %v908, %v960
      %v997 = vsel %vm894, %v913, %v964
      %v998 = vsel %vm894, %v918, %v968
      %v999 = vsel %vm894, %v923, %v972
      %v1000 = vsel %vm894, %v928, %v976
      %v1001 = vsel %vm894, %v933, %v980
      %v1002 = vsel %vm894, %v938, %v984
      %v1003 = vsel %vm894, %v943, %v988
      %v1004 = vsel %vm894, %v948, %v992
      %v1005 = vsel %vm892, 1, 0
      %vm1006 = vcmp.eq.s32.totalorder %v1005, 1
      %1007 = vset.pattern.permute.xlu0 4
      %1008 = vperm.xlu0 %1007, %v868
      %v1009 = vpop.permute.xlu0 %1008
      %1011 = vset.pattern.permute.xlu0 4
      %1012 = vperm.xlu0 %1011, %v869
      %v1013 = vpop.permute.xlu0 %1012
      %1015 = vset.pattern.permute.xlu0 4
      %1016 = vperm.xlu0 %1015, %v870
      %v1017 = vpop.permute.xlu0 %1016
      %1019 = vset.pattern.permute.xlu0 4
      %1020 = vperm.xlu0 %1019, %v871
      %v1021 = vpop.permute.xlu0 %1020
      %1023 = vset.pattern.permute.xlu0 4
      %1024 = vperm.xlu0 %1023, %v872
      %v1025 = vpop.permute.xlu0 %1024
      %1027 = vset.pattern.permute.xlu0 4
      %1028 = vperm.xlu0 %1027, %v873
      %v1029 = vpop.permute.xlu0 %1028
      %1031 = vset.pattern.permute.xlu0 4
      %1032 = vperm.xlu0 %1031, %v874
      %v1033 = vpop.permute.xlu0 %1032
      %1035 = vset.pattern.permute.xlu0 4
      %1036 = vperm.xlu0 %1035, %v875
      %v1037 = vpop.permute.xlu0 %1036
      %1039 = vset.pattern.permute.xlu0 4
      %1040 = vperm.xlu0 %1039, %v876
      %v1041 = vpop.permute.xlu0 %1040
      %1043 = vset.pattern.permute.xlu0 4
      %1044 = vperm.xlu0 %1043, %v877
      %v1045 = vpop.permute.xlu0 %1044
      %1047 = vset.pattern.permute.xlu0 4
      %1048 = vperm.xlu0 %1047, %v878
      %v1049 = vpop.permute.xlu0 %1048
      %1051 = vset.pattern.permute.xlu0 3
      %1052 = vperm.xlu0 %1051, %v868
      %v1053 = vpop.permute.xlu0 %1052
      %1055 = vset.pattern.permute.xlu0 3
      %1056 = vperm.xlu0 %1055, %v869
      %v1057 = vpop.permute.xlu0 %1056
      %1059 = vset.pattern.permute.xlu0 3
      %1060 = vperm.xlu0 %1059, %v870
      %v1061 = vpop.permute.xlu0 %1060
      %1063 = vset.pattern.permute.xlu0 3
      %1064 = vperm.xlu0 %1063, %v871
      %v1065 = vpop.permute.xlu0 %1064
      %1067 = vset.pattern.permute.xlu0 3
      %1068 = vperm.xlu0 %1067, %v872
      %v1069 = vpop.permute.xlu0 %1068
      %1071 = vset.pattern.permute.xlu0 3
      %1072 = vperm.xlu0 %1071, %v873
      %v1073 = vpop.permute.xlu0 %1072
      %1075 = vset.pattern.permute.xlu0 3
      %1076 = vperm.xlu0 %1075, %v874
      %v1077 = vpop.permute.xlu0 %1076
      %1079 = vset.pattern.permute.xlu0 3
      %1080 = vperm.xlu0 %1079, %v875
      %v1081 = vpop.permute.xlu0 %1080
      %1083 = vset.pattern.permute.xlu0 3
      %1084 = vperm.xlu0 %1083, %v876
      %v1085 = vpop.permute.xlu0 %1084
      %1087 = vset.pattern.permute.xlu0 3
      %1088 = vperm.xlu0 %1087, %v877
      %v1089 = vpop.permute.xlu0 %1088
      %1091 = vset.pattern.permute.xlu0 3
      %1092 = vperm.xlu0 %1091, %v878
      %v1093 = vpop.permute.xlu0 %1092
      %v1095 = vsel %vm1006, %v1009, %v1053
      %v1096 = vsel %vm1006, %v1013, %v1057
      %v1097 = vsel %vm1006, %v1017, %v1061
      %v1098 = vsel %vm1006, %v1021, %v1065
      %v1099 = vsel %vm1006, %v1025, %v1069
      %v1100 = vsel %vm1006, %v1029, %v1073
      %v1101 = vsel %vm1006, %v1033, %v1077
      %v1102 = vsel %vm1006, %v1037, %v1081
      %v1103 = vsel %vm1006, %v1041, %v1085
      %v1104 = vsel %vm1006, %v1045, %v1089
      %v1105 = vsel %vm1006, %v1049, %v1093
      %v1106 = vmul.f32 %v994, %v1095
      %v1107 = vmul.f32 %v995, %v1096
      %v1108 = vmul.f32 %v996, %v1097
      %v1109 = vmul.f32 %v997, %v1098
      %v1110 = vmul.f32 %v998, %v1099
      %v1111 = vmul.f32 %v999, %v1100
      %v1112 = vmul.f32 %v1000, %v1101
      %v1113 = vmul.f32 %v1001, %v1102
      %v1114 = vmul.f32 %v1002, %v1103
      %v1115 = vmul.f32 %v1003, %v1104
      %v1116 = vmul.f32 %v1004, %v1105
      %1117 = vset.pattern.permute.xlu0 0
      %1118 = vperm.xlu0 %1117, %v868
      %v1119 = vpop.permute.xlu0 %1118
      %1121 = vset.pattern.permute.xlu0 0
      %1122 = vperm.xlu0 %1121, %v869
      %v1123 = vpop.permute.xlu0 %1122
      %1125 = vset.pattern.permute.xlu0 0
      %1126 = vperm.xlu0 %1125, %v870
      %v1127 = vpop.permute.xlu0 %1126
      %1129 = vset.pattern.permute.xlu0 0
      %1130 = vperm.xlu0 %1129, %v871
      %v1131 = vpop.permute.xlu0 %1130
      %1133 = vset.pattern.permute.xlu0 0
      %1134 = vperm.xlu0 %1133, %v872
      %v1135 = vpop.permute.xlu0 %1134
      %1137 = vset.pattern.permute.xlu0 0
      %1138 = vperm.xlu0 %1137, %v873
      %v1139 = vpop.permute.xlu0 %1138
      %1141 = vset.pattern.permute.xlu0 0
      %1142 = vperm.xlu0 %1141, %v874
      %v1143 = vpop.permute.xlu0 %1142
      %1145 = vset.pattern.permute.xlu0 0
      %1146 = vperm.xlu0 %1145, %v875
      %v1147 = vpop.permute.xlu0 %1146
      %1149 = vset.pattern.permute.xlu0 0
      %1150 = vperm.xlu0 %1149, %v876
      %v1151 = vpop.permute.xlu0 %1150
      %1153 = vset.pattern.permute.xlu0 0
      %1154 = vperm.xlu0 %1153, %v877
      %v1155 = vpop.permute.xlu0 %1154
      %1157 = vset.pattern.permute.xlu0 0
      %1158 = vperm.xlu0 %1157, %v878
      %v1159 = vpop.permute.xlu0 %1158
      %v1161 = vmul.f32 %v1106, %v1119
      %v1162 = vmul.f32 %v1107, %v1123
      %v1163 = vmul.f32 %v1108, %v1127
      %v1164 = vmul.f32 %v1109, %v1131
      %v1165 = vmul.f32 %v1110, %v1135
      %v1166 = vmul.f32 %v1111, %v1139
      %v1167 = vmul.f32 %v1112, %v1143
      %v1168 = vmul.f32 %v1113, %v1147
      %v1169 = vmul.f32 %v1114, %v1151
      %v1170 = vmul.f32 %v1115, %v1155
      %v1171 = vmul.f32 %v1116, %v1159
      %v1172 = vmul.f32 %v767, %v1161
      %v1173 = vmul.f32 %v770, %v1162
      %v1174 = vmul.f32 %v775, %v1163
      %v1175 = vmul.f32 %v778, %v1164
      %v1176 = vmul.f32 %v783, %v1165
      %v1177 = vmul.f32 %v786, %v1166
      %v1178 = vmul.f32 %v791, %v1167
      %v1179 = vmul.f32 %v794, %v1168
      %v1180 = vmul.f32 %v799, %v1169
      %v1181 = vmul.f32 %v802, %v1170
      %v1182 = vmul.f32 %v807, %v1171
      %v1183 = vadd.f32 %v1172, %v1173
      %v1184 = vadd.f32 %v1183, %v1174
      %v1185 = vadd.f32 %v1184, %v1175
      %v1186 = vadd.f32 %v1185, %v1176
      %v1187 = vadd.f32 %v1186, %v1177
      %v1188 = vadd.f32 %v1187, %v1178
      %v1189 = vadd.f32 %v1188, %v1179
      %v1190 = vadd.f32 %v1189, %v1180
      %v1191 = vadd.f32 %v1190, %v1181
      %v1192 = vadd.f32 %v1191, %v1182
      %v1193 = vrot.slane %v1192, 4
      %v1194 = vadd.f32 %v1192, %v1193
      %v1195 = vrot.slane %v1194, 2
      %v1196 = vadd.f32 %v1194, %v1195
      %v1197 = vrot.slane %v1196, 1
      %v1198 = vadd.f32 %v1196, %v1197
      %v1199 = vmul.f32 %v1172, %v1172
      %v1200 = vmul.f32 %v1173, %v1173
      %v1201 = vmul.f32 %v1174, %v1174
      %v1202 = vmul.f32 %v1175, %v1175
      %v1203 = vmul.f32 %v1176, %v1176
      %v1204 = vmul.f32 %v1177, %v1177
      %v1205 = vmul.f32 %v1178, %v1178
      %v1206 = vmul.f32 %v1179, %v1179
      %v1207 = vmul.f32 %v1180, %v1180
      %v1208 = vmul.f32 %v1181, %v1181
      %v1209 = vmul.f32 %v1182, %v1182
      %v1210 = vadd.f32 %v1199, %v1200
      %v1211 = vadd.f32 %v1210, %v1201
      %v1212 = vadd.f32 %v1211, %v1202
      %v1213 = vadd.f32 %v1212, %v1203
      %v1214 = vadd.f32 %v1213, %v1204
      %v1215 = vadd.f32 %v1214, %v1205
      %v1216 = vadd.f32 %v1215, %v1206
      %v1217 = vadd.f32 %v1216, %v1207
      %v1218 = vadd.f32 %v1217, %v1208
      %v1219 = vadd.f32 %v1218, %v1209
      %v1220 = vrot.slane %v1219, 4
      %v1221 = vadd.f32 %v1219, %v1220
      %v1222 = vrot.slane %v1221, 2
      %v1223 = vadd.f32 %v1221, %v1222
      %v1224 = vrot.slane %v1223, 1
      %v1225 = vadd.f32 %v1223, %v1224
      %vm1226 = vcmask 1040384
      %v1227 = vsel %vm1226, %v1198, %v1225
      %1228 = vst [vmem:[%s236] sm:$0x3] %v1227
      %s1229 = smul.u32 11, %s16
      %p1230 = scmp.lt.s32.totalorder %s1229, 21
      %s1231 = scalar_select %p1230, %s1229, 21
      %s1232 = smul.addr %s1231, 4
      %s1233 = scalar_lea.vmem %s3, %s1232
      %p1234 = scmp.lt.s32.totalorder %s16, 1
      %s1235 = scalar_select %p1234, %s16, 1
      %s1236 = smul.addr %s1235, 2
      %s1237 = scalar_lea.vmem %s4, %s1236
      // Predicated region
      $region33: #{unet_innermost_forward.3} parent=31 // pred_check
        %p1238 = pneg %p107
      $region34: #{unet_innermost_forward.3} parent=31 // pred_check_branch
        %1240 = sbr.rel (%p1238) target = $region36
      $region35: #{unet_innermost_forward.3} parent=31 // pred_region
        %s1241 = smul.u32 11, %s16
      $region36: #{unet_innermost_forward.3} parent=31 // pred_fallthru
        _
      // Predicated region
      $region37: #{unet_innermost_forward.3} parent=31 // pred_check
        %p1242 = pneg %p133
      $region38: #{unet_innermost_forward.3} parent=31 // pred_check_branch
        %1244 = sbr.rel (%p1242) target = $region40
      $region39: #{unet_innermost_forward.3} parent=31 // pred_region
        _
      $region40: #{unet_innermost_forward.3} parent=31 // pred_fallthru
        _
    $region32: #{unet_innermost_forward.3} parent=5 // pred_fallthru
      _
    %p1245 = scmp.le.s32.totalorder 2, %s11
    // Predicated region
    $region41: #{unet_innermost_forward.3} parent=5 // pred_check
      %p1246 = pneg %p1245
    $region42: #{unet_innermost_forward.3} parent=5 // pred_check_branch
      %1248 = sbr.rel (%p1246) target = $region44
    $region43: #{unet_innermost_forward.3} parent=5 // pred_region
      %s1249 = ssub.s32 %s11, 2
      // Predicated region
      $region45: #{unet_innermost_forward.3} parent=43 // pred_check
        %p1250 = pneg %p113
      $region46: #{unet_innermost_forward.3} parent=43 // pred_check_branch
        %1252 = sbr.rel (%p1250) target = $region48
      $region47: #{unet_innermost_forward.3} parent=43 // pred_region
        %s1253 = smul.u32 11, %s17
        %p1254 = scmp.lt.s32.totalorder %s1253, 21
        %s1255 = scalar_select %p1254, %s1253, 21
        %s1256 = smul.addr %s1255, 4
        %s1257 = scalar_lea.vmem %s3, %s1256
      $region48: #{unet_innermost_forward.3} parent=43 // pred_fallthru
        _
      // Predicated region
      $region49: #{unet_innermost_forward.3} parent=43 // pred_check
        %p1258 = pneg %p139
      $region50: #{unet_innermost_forward.3} parent=43 // pred_check_branch
        %1260 = sbr.rel (%p1258) target = $region52
      $region51: #{unet_innermost_forward.3} parent=43 // pred_region
        %p1261 = scmp.lt.s32.totalorder %s17, 1
        %s1262 = scalar_select %p1261, %s17, 1
        %s1263 = smul.addr %s1262, 2
        %s1264 = scalar_lea.vmem %s4, %s1263
      $region52: #{unet_innermost_forward.3} parent=43 // pred_fallthru
        _
    $region44: #{unet_innermost_forward.3} parent=5 // pred_fallthru
      _
  $region6: #{unet_innermost_forward.3} parent=0 // loop_footer
    %s15 = sadd.s32 1, %s11
  $region7: #{unet_innermost_forward.3} parent=0 // loop_footer_branch
    %10 = sbr.rel target = $region3
  $region8: #{unet_innermost_forward.3} parent=0 // loop_exit
    _

</llo_original>
